<compile_context>
chip_gen: v7x
topology: tpu7x:2x2x1
jax: 0.10.0
libtpu: 0.0.40
codegen_flags: <defaults>
</compile_context>

<pallas_src>
import functools

import numpy as np
import jax
import jax.numpy as jnp
from jax.experimental import pallas as pl
from jax.experimental.pallas import tpu as pltpu


# ------------------------- in-kernel math helpers -------------------------

def _atan_f32(x):
    """float32 atan via cephes atanf range-reduction + degree-9 odd polynomial.
    Exact divides (cold path; approx reciprocal error would leak into the
    phase cumsum)."""
    sgn = jnp.where(x < 0.0, -1.0, 1.0)
    ax = jnp.abs(x)
    tan3pio8 = 2.414213562373095
    tanpio8 = 0.4142135623730950
    big = ax > tan3pio8
    mid = jnp.logical_and(ax > tanpio8, jnp.logical_not(big))
    safe = jnp.where(ax == 0.0, 1.0, ax)
    z = jnp.where(big, -1.0 / safe, jnp.where(mid, (ax - 1.0) / (ax + 1.0), ax))
    off = jnp.where(big, np.pi / 2.0, jnp.where(mid, np.pi / 4.0, 0.0))
    zz = z * z
    poly = ((((8.05374449538e-2 * zz - 1.38776856032e-1) * zz
              + 1.99777106478e-1) * zz - 3.33329491539e-1) * zz * z + z)
    return sgn * (off + poly)


def _atan2_f32(y, x):
    """torch.angle(complex(x, y)) == atan2(y, x), with quadrant handling."""
    safe_x = jnp.where(x == 0.0, 1.0, x)
    a = _atan_f32(y / safe_x)
    a = jnp.where(x > 0.0, a,
                  jnp.where(y >= 0.0, a + np.pi, a - np.pi))
    a = jnp.where(x == 0.0,
                  jnp.where(y > 0.0, np.pi / 2.0,
                            jnp.where(y < 0.0, -np.pi / 2.0, 0.0)),
                  a)
    return a


# ------------------------------ Pallas kernel ------------------------------

def _osc_bank_kernel(x_ref, w_ref, b_ref, u_ref, uc_ref, ones_ref, o_ref,
                     amp_s, frq_s, carry_s, *,
                     n_osc, b_blk, base_freq, freq_range):
    t = pl.program_id(1)

    # Per batch-block setup (cold path, once per batch block on its first time
    # tile): conv1x1 + amp / (freq*pi) stored to VMEM scratch; phase carry reset.
    @pl.when(t == 0)
    def _precompute():
        w = w_ref[...]                                      # (2n, C), 0.01 folded
        bias = b_ref[...]                                   # (2n, 1), baselines folded
        for bi in range(b_blk):
            y = jnp.dot(w, x_ref[bi],
                        preferred_element_type=jnp.float32) + bias
            r, im = y[:n_osc, :], y[n_osc:, :]              # (n_osc, T) each
            # amp**2 == r*r + im*im  (sqrt removed), then freq-range mapping.
            amp = base_freq + (r * r + im * im) * freq_range
            ang = _atan2_f32(im, r)
            frq = (ang * ang) * (1.0 / np.pi)               # == ((ang/pi)**2) * pi
            amp_s[bi * n_osc:(bi + 1) * n_osc, :] = amp.astype(jnp.bfloat16)
            frq_s[bi * n_osc:(bi + 1) * n_osc, :] = frq
        carry_s[...] = jnp.zeros_like(carry_s)

    # Linear interpolation of amp for this output-time tile (bf16 MXU, f32 acc).
    amp_up = jnp.dot(amp_s[...], u_ref[...],
                     preferred_element_type=jnp.float32)    # (R, tile)
    # Blocked cumsum: Ucum is the within-tile column-cumsum of U, so one matmul
    # yields the local cumulative phase; add the carried phase.
    phase = carry_s[...] + jnp.dot(frq_s[...], uc_ref[...],
                                   preferred_element_type=jnp.float32)
    # Carry to next tile, wrapped mod 2*pi (sin is periodic; keeps f32 accurate
    # at long n_audio_samples).
    last = phase[:, -1:]
    two_pi = 2.0 * np.pi
    carry_s[...] = last - two_pi * jnp.floor(last * (1.0 / two_pi) + 0.5)

    osc = jnp.sin(phase) * amp_up                           # (R, tile), VALU/EUP
    # Oscillator sum on the MXU (block-diag ones), single lane-dense store.
    acc = jnp.dot(ones_ref[...], osc,
                  preferred_element_type=jnp.float32)       # (b_blk, tile)
    o_ref[0] = acc


# ------------------------- host-side constant builder -------------------------

@functools.lru_cache(maxsize=None)
def _build_interp_constants(t_in, t_out, tile):
    """U: x @ U == F.interpolate(x, t_out, mode='linear', align_corners=False).
       Ucum: within each `tile`-wide column block, the column-wise cumulative
       sum of U (so freq @ Ucum == per-tile cumsum of the interpolated freq)."""
    scale = t_in / t_out
    j = np.arange(t_out, dtype=np.float64)
    src = np.maximum((j + 0.5) * scale - 0.5, 0.0)          # align_corners=False
    i0 = np.minimum(np.floor(src).astype(np.int64), t_in - 1)
    i1 = np.minimum(i0 + 1, t_in - 1)
    lam = src - i0
    U = np.zeros((t_in, t_out), np.float64)
    cols = np.arange(t_out)
    np.add.at(U, (i0, cols), 1.0 - lam)
    np.add.at(U, (i1, cols), lam)
    Ucum = np.cumsum(U.reshape(t_in, t_out // tile, tile), axis=-1)
    Ucum = Ucum.reshape(t_in, t_out)
    return U.astype(np.float32), Ucum.astype(np.float32)


def _padded_bytes(shape, itemsize, sublane=8):
    """Rough VMEM footprint of one buffer ((sublane,128) tile padding)."""
    s = [int(d) for d in shape]
    s[-1] = -(-s[-1] // 128) * 128
    if len(s) >= 2:
        s[-2] = -(-s[-2] // sublane) * sublane
    n = 1
    for d in s:
        n *= d
    return n * itemsize


# --------------------------------- wrapper ---------------------------------

def unconstrained_oscillator_bank(x, conv_w, conv_b, baselines, *,
                                  n_osc, n_audio_samples,
                                  min_frequency_hz=40.0,
                                  max_frequency_hz=9000.0,
                                  samplerate=22050.0,
                                  time_tile=None,
                                  batch_block=None):
    B, C, T = x.shape
    nyquist = samplerate / 2.0
    base_freq = min_frequency_hz / nyquist
    freq_range = max_frequency_hz / nyquist - base_freq

    # Default tile: as large as reasonably possible to amortize per-step
    # overhead / carry RMW (must divide n_audio_samples, lane-aligned).
    if time_tile is None:
        if n_audio_samples <= 4096:
            time_tile = n_audio_samples
        else:
            time_tile = n_audio_samples
            for cand in range(4096, 127, -128):
                if n_audio_samples % cand == 0:
                    time_tile = cand
                    break
    assert n_audio_samples % time_tile == 0
    assert time_tile == n_audio_samples or time_tile % 128 == 0

    # Default batch block: fill MXU rows (R >= 256); keep >= 2 "parallel" grid
    # points for v7x megacore only when that does not drop R below 256.
    if batch_block is None:
        batch_block = B
        if B % 2 == 0 and (B // 2) * n_osc >= 256:
            batch_block = B // 2
    assert B % batch_block == 0
    R = batch_block * n_osc

    # Glue: drop conv kernel dim, de-interleave [r0,i0,r1,i1,...] -> [r...; i...],
    # fold the 0.01 scale and the baselines into the weight / bias.
    w = conv_w[..., 0].reshape(n_osc, 2, C) * 0.01
    w_k = jnp.concatenate([w[:, 0, :], w[:, 1, :]], axis=0)          # (2n, C)
    b = conv_b.reshape(n_osc, 2) * 0.01 + baselines                  # (n, 2)
    b_k = jnp.concatenate([b[:, 0], b[:, 1]], axis=0)[:, None]       # (2n, 1)

    U_np, Ucum_np = _build_interp_constants(T, n_audio_samples, time_tile)
    U = jnp.asarray(U_np, dtype=jnp.bfloat16)   # amp path (precision-tolerant)
    Ucum = jnp.asarray(Ucum_np)                 # phase path stays f32

    # Block-diagonal ones for the MXU oscillator sum: (b_blk, R).
    ones_bd = jnp.asarray(np.kron(np.eye(batch_block, dtype=np.float32),
                                  np.ones((1, n_osc), np.float32)))

    kernel = functools.partial(_osc_bank_kernel, n_osc=n_osc, b_blk=batch_block,
                               base_freq=base_freq, freq_range=freq_range)

    grid = (B // batch_block, n_audio_samples // time_tile)

    # Scoped-VMEM budget: double-buffered inputs/outputs + persistent scratch.
    need = 2 * (
        _padded_bytes((T, time_tile), 2, 16) +          # U slice (bf16)
        _padded_bytes((T, time_tile), 4) +              # Ucum slice (f32)
        _padded_bytes((batch_block, C, T), 4) +         # x block
        _padded_bytes((2 * n_osc, C), 4) +
        _padded_bytes((2 * n_osc, 1), 4) +
        _padded_bytes((batch_block, R), 4) +
        _padded_bytes((1, batch_block, time_tile), 4))  # output block
    need += (_padded_bytes((R, T), 2, 16) +             # amp scratch (bf16)
             _padded_bytes((R, T), 4) +                 # frq scratch
             _padded_bytes((R, 1), 4))                  # carry
    vmem_limit = int(need + (8 << 20)) if need > (24 << 20) else None

    out = pl.pallas_call(
        kernel,
        out_shape=jax.ShapeDtypeStruct(
            (B // batch_block, batch_block, n_audio_samples), jnp.float32),
        grid=grid,
        in_specs=[
            pl.BlockSpec((batch_block, C, T), lambda bb, t: (bb, 0, 0)),
            pl.BlockSpec((2 * n_osc, C), lambda bb, t: (0, 0)),
            pl.BlockSpec((2 * n_osc, 1), lambda bb, t: (0, 0)),
            pl.BlockSpec((T, time_tile), lambda bb, t: (0, t)),   # U slice (bf16)
            pl.BlockSpec((T, time_tile), lambda bb, t: (0, t)),   # Ucum slice
            pl.BlockSpec((batch_block, R), lambda bb, t: (0, 0)), # ones_bd
        ],
        out_specs=pl.BlockSpec((1, batch_block, time_tile),
                               lambda bb, t: (bb, 0, t)),
        scratch_shapes=[
            pltpu.VMEM((R, T), jnp.bfloat16),  # amp (pre-upsample), bf16
            pltpu.VMEM((R, T), jnp.float32),   # freq * pi (pre-upsample)
            pltpu.VMEM((R, 1), jnp.float32),   # carried phase
        ],
        compiler_params=pltpu.CompilerParams(
            dimension_semantics=("parallel", "arbitrary"),
            vmem_limit_bytes=vmem_limit),
    )(x, w_k, b_k, U, Ucum, ones_bd)

    # (B//bblk, bblk, T_out) -> (B, 1, T_out); batch ordering is preserved.
    return out.reshape(B, 1, n_audio_samples)


# ---------------------------- pure-JAX reference ----------------------------

def reference_forward(x, conv_w, conv_b, baselines, n_osc, n_audio_samples,
                      min_frequency_hz=40.0, max_frequency_hz=9000.0,
                      samplerate=22050.0):
    B, C, T = x.shape
    w = conv_w[..., 0]
    y = jnp.einsum('oc,bct->bot', w, x) + conv_b[None, :, None]
    y = y.reshape(B, n_osc, 2, T) * 0.01 + baselines[None, :, :, None]
    r, im = y[:, :, 0, :], y[:, :, 1, :]
    amp = jnp.sqrt(r * r + im * im) ** 2
    freq = (jnp.arctan2(im, r) / np.pi) ** 2
    nyq = samplerate / 2.0
    base = min_frequency_hz / nyq
    rng = max_frequency_hz / nyq - base
    amp = base + amp * rng
    U, _ = _build_interp_constants(T, n_audio_samples, n_audio_samples)
    U = jnp.asarray(U)
    amp = jnp.einsum('bot,ts->bos', amp, U)
    freq = jnp.einsum('bot,ts->bos', freq, U)
    osc = jnp.sin(jnp.cumsum(freq * np.pi, axis=-1)) * amp
    return jnp.sum(osc, axis=1, keepdims=True)


# ----------------------------------- main -----------------------------------

if __name__ == "__main__":
    B, C, T = 2, 4, 8
    N_OSC = 8
    N_AUDIO = 256

    key = jax.random.PRNGKey(0)
    kw, kb, kbase, kx = jax.random.split(key, 4)
    bound = 1.0 / float(np.sqrt(C))  # Conv1d default init scale (fan_in = C * 1)
    conv_w = jax.random.uniform(kw, (N_OSC * 2, C, 1), jnp.float32, -bound, bound)
    conv_b = jax.random.uniform(kb, (N_OSC * 2,), jnp.float32, -bound, bound)
    baselines = jax.random.uniform(kbase, (N_OSC, 2), jnp.float32, 0.0, 0.1)
    x = jax.random.normal(kx, (B, C, T), jnp.float32)

    ref = jax.block_until_ready(
        reference_forward(x, conv_w, conv_b, baselines, N_OSC, N_AUDIO))

    # time_tile=128 -> 2 output-time tiles: exercises the carried-phase /
    # mod-2pi wrap path and the MXU oscillator-sum epilogue.
    out = unconstrained_oscillator_bank(x, conv_w, conv_b, baselines,
                                        n_osc=N_OSC, n_audio_samples=N_AUDIO,
                                        time_tile=128, batch_block=B)
    out = jax.block_until_ready(out)
    assert out.shape == (B, 1, N_AUDIO), out.shape
    err = float(np.max(np.abs(np.asarray(out) - np.asarray(ref))))
    assert np.allclose(np.asarray(out), np.asarray(ref), atol=5e-3), err

    # batch_block=1 -> 2 independent batch blocks on the "parallel" grid axis
    # (megacore-friendly on v7x); checks scratch re-init per batch block and
    # the (1, 1, tile) output block path.
    out2 = jax.block_until_ready(
        unconstrained_oscillator_bank(x, conv_w, conv_b, baselines,
                                      n_osc=N_OSC, n_audio_samples=N_AUDIO,
                                      time_tile=128, batch_block=1))
    err2 = float(np.max(np.abs(np.asarray(out2) - np.asarray(ref))))
    assert np.allclose(np.asarray(out2), np.asarray(ref), atol=5e-3), err2

    print("KERNEL_OK")
</pallas_src>

<mosaic_0001>
module attributes {stable_mosaic.version = 11 : i64} {
  func.func @_osc_bank_kernel(%arg0: i32, %arg1: i32, %arg2: memref<2x4x8xf32, #tpu.memory_space<vmem>>, %arg3: memref<16x4xf32, #tpu.memory_space<vmem>>, %arg4: memref<16x1xf32, #tpu.memory_space<vmem>>, %arg5: memref<8x128xbf16, #tpu.memory_space<vmem>>, %arg6: memref<8x128xf32, #tpu.memory_space<vmem>>, %arg7: memref<2x16xf32, #tpu.memory_space<vmem>>, %arg8: memref<1x2x128xf32, #tpu.memory_space<vmem>>, %arg9: memref<16x8xbf16, #tpu.memory_space<vmem>>, %arg10: memref<16x8xf32, #tpu.memory_space<vmem>>, %arg11: memref<16x1xf32, #tpu.memory_space<vmem>>) attributes {dimension_semantics = [#tpu.dimension_semantics<parallel>, #tpu.dimension_semantics<arbitrary>], iteration_bounds = array<i64: 1, 2>, scalar_prefetch = 0 : i64, scratch_operands = 3 : i64, tpu.core_type = #tpu.core_type<tc>, window_params = [{transform_indices = @transform_0, window_bounds = array<i64: 2, 4, 8>}, {pipeline_mode = #tpu.pipeline_mode<synchronous>, transform_indices = @transform_1, window_bounds = array<i64: 16, 4>}, {pipeline_mode = #tpu.pipeline_mode<synchronous>, transform_indices = @transform_2, window_bounds = array<i64: 16, 1>}, {transform_indices = @transform_3, window_bounds = array<i64: 8, 128>}, {transform_indices = @transform_4, window_bounds = array<i64: 8, 128>}, {pipeline_mode = #tpu.pipeline_mode<synchronous>, transform_indices = @transform_5, window_bounds = array<i64: 2, 16>}, {transform_indices = @transform_6, window_bounds = array<i64: 1, 2, 128>}]} {
    %c0_i32 = arith.constant 0 : i32
    %0 = arith.cmpi eq, %arg1, %c0_i32 : i32
    %1 = arith.extui %0 : i1 to i32
    %c0_i32_0 = arith.constant 0 : i32
    %2 = arith.cmpi ne, %1, %c0_i32_0 : i32
    scf.if %2 {
      %c0_22 = arith.constant 0 : index
      %c0_23 = arith.constant 0 : index
      %29 = vector.load %arg3[%c0_22, %c0_23] : memref<16x4xf32, #tpu.memory_space<vmem>>, vector<16x4xf32>
      %c0_24 = arith.constant 0 : index
      %c0_25 = arith.constant 0 : index
      %30 = vector.load %arg4[%c0_24, %c0_25] : memref<16x1xf32, #tpu.memory_space<vmem>>, vector<16x1xf32>
      %c0_26 = arith.constant 0 : index
      %c0_27 = arith.constant 0 : index
      %c0_28 = arith.constant 0 : index
      %31 = vector.load %arg2[%c0_26, %c0_27, %c0_28] : memref<2x4x8xf32, #tpu.memory_space<vmem>>, vector<1x4x8xf32>
      %32 = vector.shape_cast %31 : vector<1x4x8xf32> to vector<4x8xf32>
      %cst_29 = arith.constant dense<0.000000e+00> : vector<16x8xf32>
      %33 = tpu.matmul %29, %32, %cst_29 {dimension_numbers = #tpu.dot_dimension_numbers<[1], [0], [0], [1], [0, 0, 1, 1], [], []>} : vector<16x4xf32>, vector<4x8xf32>, vector<16x8xf32> -> vector<16x8xf32>
      %34 = vector.broadcast %30 : vector<16x1xf32> to vector<16x8xf32>
      %35 = arith.addf %33, %34 : vector<16x8xf32>
      %36 = vector.extract_strided_slice %35 {offsets = [0, 0], sizes = [8, 8], strides = [1, 1]} : vector<16x8xf32> to vector<8x8xf32>
      %37 = vector.extract_strided_slice %35 {offsets = [8, 0], sizes = [8, 8], strides = [1, 1]} : vector<16x8xf32> to vector<8x8xf32>
      %38 = arith.mulf %36, %36 : vector<8x8xf32>
      %39 = arith.mulf %37, %37 : vector<8x8xf32>
      %40 = arith.addf %38, %39 : vector<8x8xf32>
      %cst_30 = arith.constant 0.812698423 : f32
      %41 = vector.broadcast %cst_30 : f32 to vector<8x8xf32>
      %42 = arith.mulf %40, %41 : vector<8x8xf32>
      %cst_31 = arith.constant 0.00362811796 : f32
      %43 = vector.broadcast %cst_31 : f32 to vector<8x8xf32>
      %44 = arith.addf %43, %42 : vector<8x8xf32>
      %cst_32 = arith.constant 0.000000e+00 : f32
      %45 = vector.broadcast %cst_32 : f32 to vector<8x8xf32>
      %46 = arith.cmpf oeq, %36, %45 : vector<8x8xf32>
      %cst_33 = arith.constant 1.000000e+00 : f32
      %47 = vector.broadcast %cst_33 : f32 to vector<8x8xf32>
      %48 = arith.select %46, %47, %36 : vector<8x8xi1>, vector<8x8xf32>
      %49 = arith.divf %37, %48 : vector<8x8xf32>
      %cst_34 = arith.constant 0.000000e+00 : f32
      %50 = vector.broadcast %cst_34 : f32 to vector<8x8xf32>
      %51 = arith.cmpf olt, %49, %50 : vector<8x8xf32>
      %cst_35 = arith.constant -1.000000e+00 : f32
      %cst_36 = arith.constant 1.000000e+00 : f32
      %52 = vector.broadcast %cst_35 : f32 to vector<8x8xf32>
      %53 = vector.broadcast %cst_36 : f32 to vector<8x8xf32>
      %54 = arith.select %51, %52, %53 : vector<8x8xi1>, vector<8x8xf32>
      %55 = math.absf %49 : vector<8x8xf32>
      %cst_37 = arith.constant 2.41421366 : f32
      %56 = vector.broadcast %cst_37 : f32 to vector<8x8xf32>
      %57 = arith.cmpf ogt, %55, %56 : vector<8x8xf32>
      %cst_38 = arith.constant 0.414213568 : f32
      %58 = vector.broadcast %cst_38 : f32 to vector<8x8xf32>
      %59 = arith.cmpf ogt, %55, %58 : vector<8x8xf32>
      %cst_39 = arith.constant dense<true> : vector<8x8xi1>
      %60 = arith.xori %57, %cst_39 : vector<8x8xi1>
      %61 = arith.andi %59, %60 : vector<8x8xi1>
      %cst_40 = arith.constant 0.000000e+00 : f32
      %62 = vector.broadcast %cst_40 : f32 to vector<8x8xf32>
      %63 = arith.cmpf oeq, %55, %62 : vector<8x8xf32>
      %cst_41 = arith.constant 1.000000e+00 : f32
      %64 = vector.broadcast %cst_41 : f32 to vector<8x8xf32>
      %65 = arith.select %63, %64, %55 : vector<8x8xi1>, vector<8x8xf32>
      %cst_42 = arith.constant -1.000000e+00 : f32
      %66 = vector.broadcast %cst_42 : f32 to vector<8x8xf32>
      %67 = arith.divf %66, %65 : vector<8x8xf32>
      %cst_43 = arith.constant 1.000000e+00 : f32
      %68 = vector.broadcast %cst_43 : f32 to vector<8x8xf32>
      %69 = arith.subf %55, %68 : vector<8x8xf32>
      %cst_44 = arith.constant 1.000000e+00 : f32
      %70 = vector.broadcast %cst_44 : f32 to vector<8x8xf32>
      %71 = arith.addf %55, %70 : vector<8x8xf32>
      %72 = arith.divf %69, %71 : vector<8x8xf32>
      %73 = arith.select %61, %72, %55 : vector<8x8xi1>, vector<8x8xf32>
      %74 = arith.select %57, %67, %73 : vector<8x8xi1>, vector<8x8xf32>
      %cst_45 = arith.constant 0.785398185 : f32
      %cst_46 = arith.constant 0.000000e+00 : f32
      %75 = vector.broadcast %cst_45 : f32 to vector<8x8xf32>
      %76 = vector.broadcast %cst_46 : f32 to vector<8x8xf32>
      %77 = arith.select %61, %75, %76 : vector<8x8xi1>, vector<8x8xf32>
      %cst_47 = arith.constant 1.57079637 : f32
      %78 = vector.broadcast %cst_47 : f32 to vector<8x8xf32>
      %79 = arith.select %57, %78, %77 : vector<8x8xi1>, vector<8x8xf32>
      %80 = arith.mulf %74, %74 : vector<8x8xf32>
      %cst_48 = arith.constant 0.0805374458 : f32
      %81 = vector.broadcast %cst_48 : f32 to vector<8x8xf32>
      %82 = arith.mulf %81, %80 : vector<8x8xf32>
      %cst_49 = arith.constant 0.138776854 : f32
      %83 = vector.broadcast %cst_49 : f32 to vector<8x8xf32>
      %84 = arith.subf %82, %83 : vector<8x8xf32>
      %85 = arith.mulf %84, %80 : vector<8x8xf32>
      %cst_50 = arith.constant 0.199777111 : f32
      %86 = vector.broadcast %cst_50 : f32 to vector<8x8xf32>
      %87 = arith.addf %85, %86 : vector<8x8xf32>
      %88 = arith.mulf %87, %80 : vector<8x8xf32>
      %cst_51 = arith.constant 0.333329499 : f32
      %89 = vector.broadcast %cst_51 : f32 to vector<8x8xf32>
      %90 = arith.subf %88, %89 : vector<8x8xf32>
      %91 = arith.mulf %90, %80 : vector<8x8xf32>
      %92 = arith.mulf %91, %74 : vector<8x8xf32>
      %93 = arith.addf %92, %74 : vector<8x8xf32>
      %94 = arith.addf %79, %93 : vector<8x8xf32>
      %95 = arith.mulf %54, %94 : vector<8x8xf32>
      %cst_52 = arith.constant 0.000000e+00 : f32
      %96 = vector.broadcast %cst_52 : f32 to vector<8x8xf32>
      %97 = arith.cmpf ogt, %36, %96 : vector<8x8xf32>
      %cst_53 = arith.constant 0.000000e+00 : f32
      %98 = vector.broadcast %cst_53 : f32 to vector<8x8xf32>
      %99 = arith.cmpf oge, %37, %98 : vector<8x8xf32>
      %cst_54 = arith.constant 3.14159274 : f32
      %100 = vector.broadcast %cst_54 : f32 to vector<8x8xf32>
      %101 = arith.addf %95, %100 : vector<8x8xf32>
      %cst_55 = arith.constant 3.14159274 : f32
      %102 = vector.broadcast %cst_55 : f32 to vector<8x8xf32>
      %103 = arith.subf %95, %102 : vector<8x8xf32>
      %104 = arith.select %99, %101, %103 : vector<8x8xi1>, vector<8x8xf32>
      %105 = arith.select %97, %95, %104 : vector<8x8xi1>, vector<8x8xf32>
      %cst_56 = arith.constant 0.000000e+00 : f32
      %106 = vector.broadcast %cst_56 : f32 to vector<8x8xf32>
      %107 = arith.cmpf oeq, %36, %106 : vector<8x8xf32>
      %cst_57 = arith.constant 0.000000e+00 : f32
      %108 = vector.broadcast %cst_57 : f32 to vector<8x8xf32>
      %109 = arith.cmpf ogt, %37, %108 : vector<8x8xf32>
      %cst_58 = arith.constant 0.000000e+00 : f32
      %110 = vector.broadcast %cst_58 : f32 to vector<8x8xf32>
      %111 = arith.cmpf olt, %37, %110 : vector<8x8xf32>
      %cst_59 = arith.constant -1.57079637 : f32
      %cst_60 = arith.constant 0.000000e+00 : f32
      %112 = vector.broadcast %cst_59 : f32 to vector<8x8xf32>
      %113 = vector.broadcast %cst_60 : f32 to vector<8x8xf32>
      %114 = arith.select %111, %112, %113 : vector<8x8xi1>, vector<8x8xf32>
      %cst_61 = arith.constant 1.57079637 : f32
      %115 = vector.broadcast %cst_61 : f32 to vector<8x8xf32>
      %116 = arith.select %109, %115, %114 : vector<8x8xi1>, vector<8x8xf32>
      %117 = arith.select %107, %116, %105 : vector<8x8xi1>, vector<8x8xf32>
      %118 = arith.mulf %117, %117 : vector<8x8xf32>
      %cst_62 = arith.constant 0.318309873 : f32
      %119 = vector.broadcast %cst_62 : f32 to vector<8x8xf32>
      %120 = arith.mulf %118, %119 : vector<8x8xf32>
      %121 = arith.truncf %44 : vector<8x8xf32> to vector<8x8xbf16>
      %c0_63 = arith.constant 0 : index
      %c0_64 = arith.constant 0 : index
      %122 = vector.load %arg9[%c0_63, %c0_64] : memref<16x8xbf16, #tpu.memory_space<vmem>>, vector<8x8xbf16>
      tpu.vector_store %arg9[%c0_63, %c0_64], %121 {strides = array<i32>} : memref<16x8xbf16, #tpu.memory_space<vmem>>, vector<8x8xbf16>,
      %c0_65 = arith.constant 0 : index
      %c0_66 = arith.constant 0 : index
      %123 = vector.load %arg10[%c0_65, %c0_66] : memref<16x8xf32, #tpu.memory_space<vmem>>, vector<8x8xf32>
      tpu.vector_store %arg10[%c0_65, %c0_66], %120 {strides = array<i32>} : memref<16x8xf32, #tpu.memory_space<vmem>>, vector<8x8xf32>,
      %c1 = arith.constant 1 : index
      %c0_67 = arith.constant 0 : index
      %c0_68 = arith.constant 0 : index
      %124 = vector.load %arg2[%c1, %c0_67, %c0_68] : memref<2x4x8xf32, #tpu.memory_space<vmem>>, vector<1x4x8xf32>
      %125 = vector.shape_cast %124 : vector<1x4x8xf32> to vector<4x8xf32>
      %cst_69 = arith.constant dense<0.000000e+00> : vector<16x8xf32>
      %126 = tpu.matmul %29, %125, %cst_69 {dimension_numbers = #tpu.dot_dimension_numbers<[1], [0], [0], [1], [0, 0, 1, 1], [], []>} : vector<16x4xf32>, vector<4x8xf32>, vector<16x8xf32> -> vector<16x8xf32>
      %127 = vector.broadcast %30 : vector<16x1xf32> to vector<16x8xf32>
      %128 = arith.addf %126, %127 : vector<16x8xf32>
      %129 = vector.extract_strided_slice %128 {offsets = [0, 0], sizes = [8, 8], strides = [1, 1]} : vector<16x8xf32> to vector<8x8xf32>
      %130 = vector.extract_strided_slice %128 {offsets = [8, 0], sizes = [8, 8], strides = [1, 1]} : vector<16x8xf32> to vector<8x8xf32>
      %131 = arith.mulf %129, %129 : vector<8x8xf32>
      %132 = arith.mulf %130, %130 : vector<8x8xf32>
      %133 = arith.addf %131, %132 : vector<8x8xf32>
      %cst_70 = arith.constant 0.812698423 : f32
      %134 = vector.broadcast %cst_70 : f32 to vector<8x8xf32>
      %135 = arith.mulf %133, %134 : vector<8x8xf32>
      %cst_71 = arith.constant 0.00362811796 : f32
      %136 = vector.broadcast %cst_71 : f32 to vector<8x8xf32>
      %137 = arith.addf %136, %135 : vector<8x8xf32>
      %cst_72 = arith.constant 0.000000e+00 : f32
      %138 = vector.broadcast %cst_72 : f32 to vector<8x8xf32>
      %139 = arith.cmpf oeq, %129, %138 : vector<8x8xf32>
      %cst_73 = arith.constant 1.000000e+00 : f32
      %140 = vector.broadcast %cst_73 : f32 to vector<8x8xf32>
      %141 = arith.select %139, %140, %129 : vector<8x8xi1>, vector<8x8xf32>
      %142 = arith.divf %130, %141 : vector<8x8xf32>
      %cst_74 = arith.constant 0.000000e+00 : f32
      %143 = vector.broadcast %cst_74 : f32 to vector<8x8xf32>
      %144 = arith.cmpf olt, %142, %143 : vector<8x8xf32>
      %cst_75 = arith.constant -1.000000e+00 : f32
      %cst_76 = arith.constant 1.000000e+00 : f32
      %145 = vector.broadcast %cst_75 : f32 to vector<8x8xf32>
      %146 = vector.broadcast %cst_76 : f32 to vector<8x8xf32>
      %147 = arith.select %144, %145, %146 : vector<8x8xi1>, vector<8x8xf32>
      %148 = math.absf %142 : vector<8x8xf32>
      %cst_77 = arith.constant 2.41421366 : f32
      %149 = vector.broadcast %cst_77 : f32 to vector<8x8xf32>
      %150 = arith.cmpf ogt, %148, %149 : vector<8x8xf32>
      %cst_78 = arith.constant 0.414213568 : f32
      %151 = vector.broadcast %cst_78 : f32 to vector<8x8xf32>
      %152 = arith.cmpf ogt, %148, %151 : vector<8x8xf32>
      %cst_79 = arith.constant dense<true> : vector<8x8xi1>
      %153 = arith.xori %150, %cst_79 : vector<8x8xi1>
      %154 = arith.andi %152, %153 : vector<8x8xi1>
      %cst_80 = arith.constant 0.000000e+00 : f32
      %155 = vector.broadcast %cst_80 : f32 to vector<8x8xf32>
      %156 = arith.cmpf oeq, %148, %155 : vector<8x8xf32>
      %cst_81 = arith.constant 1.000000e+00 : f32
      %157 = vector.broadcast %cst_81 : f32 to vector<8x8xf32>
      %158 = arith.select %156, %157, %148 : vector<8x8xi1>, vector<8x8xf32>
      %cst_82 = arith.constant -1.000000e+00 : f32
      %159 = vector.broadcast %cst_82 : f32 to vector<8x8xf32>
      %160 = arith.divf %159, %158 : vector<8x8xf32>
      %cst_83 = arith.constant 1.000000e+00 : f32
      %161 = vector.broadcast %cst_83 : f32 to vector<8x8xf32>
      %162 = arith.subf %148, %161 : vector<8x8xf32>
      %cst_84 = arith.constant 1.000000e+00 : f32
      %163 = vector.broadcast %cst_84 : f32 to vector<8x8xf32>
      %164 = arith.addf %148, %163 : vector<8x8xf32>
      %165 = arith.divf %162, %164 : vector<8x8xf32>
      %166 = arith.select %154, %165, %148 : vector<8x8xi1>, vector<8x8xf32>
      %167 = arith.select %150, %160, %166 : vector<8x8xi1>, vector<8x8xf32>
      %cst_85 = arith.constant 0.785398185 : f32
      %cst_86 = arith.constant 0.000000e+00 : f32
      %168 = vector.broadcast %cst_85 : f32 to vector<8x8xf32>
      %169 = vector.broadcast %cst_86 : f32 to vector<8x8xf32>
      %170 = arith.select %154, %168, %169 : vector<8x8xi1>, vector<8x8xf32>
      %cst_87 = arith.constant 1.57079637 : f32
      %171 = vector.broadcast %cst_87 : f32 to vector<8x8xf32>
      %172 = arith.select %150, %171, %170 : vector<8x8xi1>, vector<8x8xf32>
      %173 = arith.mulf %167, %167 : vector<8x8xf32>
      %cst_88 = arith.constant 0.0805374458 : f32
      %174 = vector.broadcast %cst_88 : f32 to vector<8x8xf32>
      %175 = arith.mulf %174, %173 : vector<8x8xf32>
      %cst_89 = arith.constant 0.138776854 : f32
      %176 = vector.broadcast %cst_89 : f32 to vector<8x8xf32>
      %177 = arith.subf %175, %176 : vector<8x8xf32>
      %178 = arith.mulf %177, %173 : vector<8x8xf32>
      %cst_90 = arith.constant 0.199777111 : f32
      %179 = vector.broadcast %cst_90 : f32 to vector<8x8xf32>
      %180 = arith.addf %178, %179 : vector<8x8xf32>
      %181 = arith.mulf %180, %173 : vector<8x8xf32>
      %cst_91 = arith.constant 0.333329499 : f32
      %182 = vector.broadcast %cst_91 : f32 to vector<8x8xf32>
      %183 = arith.subf %181, %182 : vector<8x8xf32>
      %184 = arith.mulf %183, %173 : vector<8x8xf32>
      %185 = arith.mulf %184, %167 : vector<8x8xf32>
      %186 = arith.addf %185, %167 : vector<8x8xf32>
      %187 = arith.addf %172, %186 : vector<8x8xf32>
      %188 = arith.mulf %147, %187 : vector<8x8xf32>
      %cst_92 = arith.constant 0.000000e+00 : f32
      %189 = vector.broadcast %cst_92 : f32 to vector<8x8xf32>
      %190 = arith.cmpf ogt, %129, %189 : vector<8x8xf32>
      %cst_93 = arith.constant 0.000000e+00 : f32
      %191 = vector.broadcast %cst_93 : f32 to vector<8x8xf32>
      %192 = arith.cmpf oge, %130, %191 : vector<8x8xf32>
      %cst_94 = arith.constant 3.14159274 : f32
      %193 = vector.broadcast %cst_94 : f32 to vector<8x8xf32>
      %194 = arith.addf %188, %193 : vector<8x8xf32>
      %cst_95 = arith.constant 3.14159274 : f32
      %195 = vector.broadcast %cst_95 : f32 to vector<8x8xf32>
      %196 = arith.subf %188, %195 : vector<8x8xf32>
      %197 = arith.select %192, %194, %196 : vector<8x8xi1>, vector<8x8xf32>
      %198 = arith.select %190, %188, %197 : vector<8x8xi1>, vector<8x8xf32>
      %cst_96 = arith.constant 0.000000e+00 : f32
      %199 = vector.broadcast %cst_96 : f32 to vector<8x8xf32>
      %200 = arith.cmpf oeq, %129, %199 : vector<8x8xf32>
      %cst_97 = arith.constant 0.000000e+00 : f32
      %201 = vector.broadcast %cst_97 : f32 to vector<8x8xf32>
      %202 = arith.cmpf ogt, %130, %201 : vector<8x8xf32>
      %cst_98 = arith.constant 0.000000e+00 : f32
      %203 = vector.broadcast %cst_98 : f32 to vector<8x8xf32>
      %204 = arith.cmpf olt, %130, %203 : vector<8x8xf32>
      %cst_99 = arith.constant -1.57079637 : f32
      %cst_100 = arith.constant 0.000000e+00 : f32
      %205 = vector.broadcast %cst_99 : f32 to vector<8x8xf32>
      %206 = vector.broadcast %cst_100 : f32 to vector<8x8xf32>
      %207 = arith.select %204, %205, %206 : vector<8x8xi1>, vector<8x8xf32>
      %cst_101 = arith.constant 1.57079637 : f32
      %208 = vector.broadcast %cst_101 : f32 to vector<8x8xf32>
      %209 = arith.select %202, %208, %207 : vector<8x8xi1>, vector<8x8xf32>
      %210 = arith.select %200, %209, %198 : vector<8x8xi1>, vector<8x8xf32>
      %211 = arith.mulf %210, %210 : vector<8x8xf32>
      %cst_102 = arith.constant 0.318309873 : f32
      %212 = vector.broadcast %cst_102 : f32 to vector<8x8xf32>
      %213 = arith.mulf %211, %212 : vector<8x8xf32>
      %214 = arith.truncf %137 : vector<8x8xf32> to vector<8x8xbf16>
      %c8 = arith.constant 8 : index
      %c0_103 = arith.constant 0 : index
      %215 = vector.load %arg9[%c8, %c0_103] : memref<16x8xbf16, #tpu.memory_space<vmem>>, vector<8x8xbf16>
      tpu.vector_store %arg9[%c8, %c0_103], %214 {strides = array<i32>} : memref<16x8xbf16, #tpu.memory_space<vmem>>, vector<8x8xbf16>,
      %c8_104 = arith.constant 8 : index
      %c0_105 = arith.constant 0 : index
      %216 = vector.load %arg10[%c8_104, %c0_105] : memref<16x8xf32, #tpu.memory_space<vmem>>, vector<8x8xf32>
      tpu.vector_store %arg10[%c8_104, %c0_105], %213 {strides = array<i32>} : memref<16x8xf32, #tpu.memory_space<vmem>>, vector<8x8xf32>,
      %cst_106 = arith.constant 0.000000e+00 : f32
      %217 = vector.broadcast %cst_106 : f32 to vector<16x1xf32>
      %c0_107 = arith.constant 0 : index
      %c0_108 = arith.constant 0 : index
      %218 = vector.load %arg11[%c0_107, %c0_108] : memref<16x1xf32, #tpu.memory_space<vmem>>, vector<16x1xf32>
      tpu.vector_store %arg11[%c0_107, %c0_108], %217 {strides = array<i32>} : memref<16x1xf32, #tpu.memory_space<vmem>>, vector<16x1xf32>,
    } else {
    }
    %c0 = arith.constant 0 : index
    %c0_1 = arith.constant 0 : index
    %3 = vector.load %arg9[%c0, %c0_1] : memref<16x8xbf16, #tpu.memory_space<vmem>>, vector<16x8xbf16>
    %c0_2 = arith.constant 0 : index
    %c0_3 = arith.constant 0 : index
    %4 = vector.load %arg5[%c0_2, %c0_3] : memref<8x128xbf16, #tpu.memory_space<vmem>>, vector<8x128xbf16>
    %cst = arith.constant dense<0.000000e+00> : vector<16x128xf32>
    %5 = tpu.matmul %3, %4, %cst {dimension_numbers = #tpu.dot_dimension_numbers<[1], [0], [0], [1], [0, 0, 1, 1], [], []>} : vector<16x8xbf16>, vector<8x128xbf16>, vector<16x128xf32> -> vector<16x128xf32>
    %c0_4 = arith.constant 0 : index
    %c0_5 = arith.constant 0 : index
    %6 = vector.load %arg11[%c0_4, %c0_5] : memref<16x1xf32, #tpu.memory_space<vmem>>, vector<16x1xf32>
    %c0_6 = arith.constant 0 : index
    %c0_7 = arith.constant 0 : index
    %7 = vector.load %arg10[%c0_6, %c0_7] : memref<16x8xf32, #tpu.memory_space<vmem>>, vector<16x8xf32>
    %c0_8 = arith.constant 0 : index
    %c0_9 = arith.constant 0 : index
    %8 = vector.load %arg6[%c0_8, %c0_9] : memref<8x128xf32, #tpu.memory_space<vmem>>, vector<8x128xf32>
    %cst_10 = arith.constant dense<0.000000e+00> : vector<16x128xf32>
    %9 = tpu.matmul %7, %8, %cst_10 {dimension_numbers = #tpu.dot_dimension_numbers<[1], [0], [0], [1], [0, 0, 1, 1], [], []>} : vector<16x8xf32>, vector<8x128xf32>, vector<16x128xf32> -> vector<16x128xf32>
    %10 = vector.broadcast %6 : vector<16x1xf32> to vector<16x128xf32>
    %11 = arith.addf %10, %9 : vector<16x128xf32>
    %12 = vector.extract_strided_slice %11 {offsets = [0, 127], sizes = [16, 1], strides = [1, 1]} : vector<16x128xf32> to vector<16x1xf32>
    %cst_11 = arith.constant 0.159154937 : f32
    %13 = vector.broadcast %cst_11 : f32 to vector<16x1xf32>
    %14 = arith.mulf %12, %13 : vector<16x1xf32>
    %cst_12 = arith.constant 5.000000e-01 : f32
    %15 = vector.broadcast %cst_12 : f32 to vector<16x1xf32>
    %16 = arith.addf %14, %15 : vector<16x1xf32>
    %17 = math.floor %16 : vector<16x1xf32>
    %cst_13 = arith.constant 6.28318548 : f32
    %18 = vector.broadcast %cst_13 : f32 to vector<16x1xf32>
    %19 = arith.mulf %18, %17 : vector<16x1xf32>
    %20 = arith.subf %12, %19 : vector<16x1xf32>
    %c0_14 = arith.constant 0 : index
    %c0_15 = arith.constant 0 : index
    %21 = vector.load %arg11[%c0_14, %c0_15] : memref<16x1xf32, #tpu.memory_space<vmem>>, vector<16x1xf32>
    tpu.vector_store %arg11[%c0_14, %c0_15], %20 {strides = array<i32>} : memref<16x1xf32, #tpu.memory_space<vmem>>, vector<16x1xf32>,
    %22 = math.sin %11 : vector<16x128xf32>
    %23 = arith.mulf %22, %5 : vector<16x128xf32>
    %c0_16 = arith.constant 0 : index
    %c0_17 = arith.constant 0 : index
    %24 = vector.load %arg7[%c0_16, %c0_17] : memref<2x16xf32, #tpu.memory_space<vmem>>, vector<2x16xf32>
    %cst_18 = arith.constant dense<0.000000e+00> : vector<2x128xf32>
    %25 = tpu.matmul %24, %23, %cst_18 {dimension_numbers = #tpu.dot_dimension_numbers<[1], [0], [0], [1], [0, 0, 1, 1], [], []>} : vector<2x16xf32>, vector<16x128xf32>, vector<2x128xf32> -> vector<2x128xf32>
    %c0_19 = arith.constant 0 : index
    %c0_20 = arith.constant 0 : index
    %c0_21 = arith.constant 0 : index
    %26 = vector.load %arg8[%c0_19, %c0_20, %c0_21] : memref<1x2x128xf32, #tpu.memory_space<vmem>>, vector<1x2x128xf32>
    %27 = vector.shape_cast %26 : vector<1x2x128xf32> to vector<2x128xf32>
    %28 = vector.shape_cast %25 : vector<2x128xf32> to vector<1x2x128xf32>
    tpu.vector_store %arg8[%c0_19, %c0_20, %c0_21], %28 {strides = array<i32>} : memref<1x2x128xf32, #tpu.memory_space<vmem>>, vector<1x2x128xf32>,
    return
  }
  func.func @transform_0(%arg0: i32, %arg1: i32) -> (i32, i32, i32) {
    %c0_i32 = arith.constant 0 : i32
    %c0_i32_0 = arith.constant 0 : i32
    %c0_i32_1 = arith.constant 0 : i32
    return %arg0, %c0_i32, %c0_i32_0 : i32, i32, i32
  }
  func.func @transform_1(%arg0: i32, %arg1: i32) -> (i32, i32) {
    %c0_i32 = arith.constant 0 : i32
    %c0_i32_0 = arith.constant 0 : i32
    %c0_i32_1 = arith.constant 0 : i32
    return %c0_i32, %c0_i32_0 : i32, i32
  }
  func.func @transform_2(%arg0: i32, %arg1: i32) -> (i32, i32) {
    %c0_i32 = arith.constant 0 : i32
    %c0_i32_0 = arith.constant 0 : i32
    %c0_i32_1 = arith.constant 0 : i32
    return %c0_i32, %c0_i32_0 : i32, i32
  }
  func.func @transform_3(%arg0: i32, %arg1: i32) -> (i32, i32) {
    %c0_i32 = arith.constant 0 : i32
    %c0_i32_0 = arith.constant 0 : i32
    return %c0_i32, %arg1 : i32, i32
  }
  func.func @transform_4(%arg0: i32, %arg1: i32) -> (i32, i32) {
    %c0_i32 = arith.constant 0 : i32
    %c0_i32_0 = arith.constant 0 : i32
    return %c0_i32, %arg1 : i32, i32
  }
  func.func @transform_5(%arg0: i32, %arg1: i32) -> (i32, i32) {
    %c0_i32 = arith.constant 0 : i32
    %c0_i32_0 = arith.constant 0 : i32
    %c0_i32_1 = arith.constant 0 : i32
    return %c0_i32, %c0_i32_0 : i32, i32
  }
  func.func @transform_6(%arg0: i32, %arg1: i32) -> (i32, i32, i32) {
    %c0_i32 = arith.constant 0 : i32
    %c0_i32_0 = arith.constant 0 : i32
    return %arg0, %c0_i32, %arg1 : i32, i32, i32
  }
}

</mosaic_0001>

<llo_original>
// kernel: tpu_custom_call.1
$region0: #{tpu_custom_call.1}
  #allocation0 [shape = 'u32[]', space=smem, size = 0x4, offset = 0x4, fixed_abs, tag = 'smem constant byte address 0x4 - core index']
  #allocation1 [shape = 'u32[144,128]{1,0:T(1,128)}', space=vmem, size = 0x12000, scoped, tag = 'internal scratch']
  #allocation2 [shape = 'bf16[16,8]{1,0:T(16,128)(2,1)}', space=vmem, size = 0x1000, scoped, tag = 'scratch operand']
  #allocation3 [shape = 'f32[16,8]{1,0:T(8,128)}', space=vmem, size = 0x2000, scoped, tag = 'scratch operand']
  #allocation4 [shape = 'f32[16,1]{1,0:T(8,128)}', space=vmem, size = 0x2000, scoped, tag = 'scratch operand']
  %s0 = inlined_call_operand.vmem [shape: f32[2,4,8], index: 0, kind: input, shape index: {}]
  %s1 = inlined_call_operand.vmem [shape: f32[16,4], index: 1, kind: input, shape index: {}]
  %s2 = inlined_call_operand.vmem [shape: f32[16,1], index: 2, kind: input, shape index: {}]
  %s3 = inlined_call_operand.vmem [shape: bf16[8,256], index: 3, kind: input, shape index: {}]
  %s4 = inlined_call_operand.vmem [shape: f32[8,256], index: 4, kind: input, shape index: {}]
  %s5 = inlined_call_operand.vmem [shape: f32[2,16], index: 5, kind: input, shape index: {}]
  %s6 = inlined_call_operand.hbm [shape: f32[1,2,256], index: 6, kind: output, shape index: {}]
  %s7 = sld [smem:[#allocation0]]
  $region61: #{tpu_custom_call.1} parent=0
    _
  %s9 = ssub.s32 1, %s7
  %s10 = scalar_select 0, %s9, %s7
  $region1: #{tpu_custom_call.1} parent=0
    #allocation5 [shape = 'u8[2048]{0}', space=vmem, size = 0x800, scoped, tag = 'output window, operand 0']
    #allocation6 [shape = 's32[2]{0}', space=sflag, size = 0x8, scoped, tag = 'scoped memory for tpu_custom_call.1']
    %11 = vsyncpa [#allocation6], 0
    %s12 = scalar_lea.sflag [#allocation6], 1
    %13 = vsyncpa %s12, 0
    loop: start=0, step=1, limit=4
    $region2: #{tpu_custom_call.1} parent=1 // loop_pre_header
      _
    $region3: #{tpu_custom_call.1} parent=1 // loop_header
      %s15 = sphi 0, %s19
      %p16 = scmp.ge.s32.totalorder %s15, 4
      %s22 = sphi 0, %s34
      %s23 = sphi 0, %s30
      %s24 = sphi 0, %s22
      %s25 = sphi 0, %s23
      %s26 = sphi 0, %s24
      %s27 = sphi 0, %s25
      %s37 = sphi 0, %s39
      %s40 = sphi 0, %s37
      %s41 = sphi 0, %s40
      %s57 = sphi 0, %s41
      %s61 = sphi 0, %s61
      %s63 = sphi 0, %s61
      %s64 = sphi 0, %s63
      %s78 = sphi 0, %s64
      %s82 = sphi 0, %s82
      %s84 = sphi 0, %s82
      %s85 = sphi 0, %s84
      %s99 = sphi 0, %s85
      %s105 = sphi 0, %s107
      %s108 = sphi 0, %s105
      %s109 = sphi 0, %s108
      %s125 = sphi 0, %s109
      %s131 = sphi 0, %s133
      %s134 = sphi 0, %s131
      %s135 = sphi 0, %s134
      %s151 = sphi 0, %s135
      %s155 = sphi 0, %s155
      %s157 = sphi 0, %s155
      %s158 = sphi 0, %s157
      %s172 = sphi 0, %s158
      %s180 = sphi 0, %s182
      %s183 = sphi 0, %s180
      %s184 = sphi 0, %s183
      %s200 = sphi 0, %s184
    $region4: #{tpu_custom_call.1} parent=1 // loop_header_branch
      %18 = sbr.rel (%p16) target = $region8
    $region5: #{tpu_custom_call.1} parent=1 // loop_body
      %s20 = ssub.s32 %s15, 1
      %s21 = ssub.s32 %s15, 2
      %s28 = sadd.s32 1, %s23
      %p29 = scmp.ge.s32.totalorder %s28, 2
      %s30 = scalar_select %p29, 0, %s28
      %s31 = sadd.s32 1, %s22
      %s32 = scalar_select %p29, %s31, %s22
      %p33 = scmp.ge.s32.totalorder %s32, 1
      %s34 = scalar_select %p33, 0, %s32
      %s35 = ssub.s32 %s22, %s34
      %p36 = scmp.eq.s32.totalorder %s35, 0
      %s38 = sadd.s32 %s37, 1
      %s39 = scalar_select %p36, %s37, %s38
      %p42 = pneg %p36
      %p43 = scmp.eq.s32.totalorder %s15, 1
      %p44 = por %p42, %p43
      %p45 = scmp.ne.s32.totalorder %s37, %s40
      %p46 = scmp.eq.s32.totalorder %s15, 0
      %p47 = por %p45, %p46
      %p48 = scmp.ne.s32.totalorder %s37, %s40
      %p49 = scmp.eq.s32.totalorder %s20, 1
      %p50 = por %p48, %p49
      %p51 = scmp.ne.s32.totalorder %s40, %s41
      %p52 = scmp.eq.s32.totalorder %s20, 0
      %p53 = por %p51, %p52
      %p54 = scmp.ne.s32.totalorder %s40, %s41
      %p55 = scmp.eq.s32.totalorder %s21, 1
      %p56 = por %p54, %p55
      %p58 = scmp.ne.s32.totalorder %s41, %s57
      %p59 = scmp.eq.s32.totalorder %s21, 0
      %p60 = por %p58, %p59
      %s62 = sadd.s32 %s61, 1
      %p65 = scmp.eq.s32.totalorder %s15, 1
      %p66 = scmp.ne.s32.totalorder %s61, %s63
      %p67 = scmp.eq.s32.totalorder %s15, 0
      %p68 = por %p66, %p67
      %p69 = scmp.ne.s32.totalorder %s61, %s63
      %p70 = scmp.eq.s32.totalorder %s20, 1
      %p71 = por %p69, %p70
      %p72 = scmp.ne.s32.totalorder %s63, %s64
      %p73 = scmp.eq.s32.totalorder %s20, 0
      %p74 = por %p72, %p73
      %p75 = scmp.ne.s32.totalorder %s63, %s64
      %p76 = scmp.eq.s32.totalorder %s21, 1
      %p77 = por %p75, %p76
      %p79 = scmp.ne.s32.totalorder %s64, %s78
      %p80 = scmp.eq.s32.totalorder %s21, 0
      %p81 = por %p79, %p80
      %s83 = sadd.s32 %s82, 1
      %p86 = scmp.eq.s32.totalorder %s15, 1
      %p87 = scmp.ne.s32.totalorder %s82, %s84
      %p88 = scmp.eq.s32.totalorder %s15, 0
      %p89 = por %p87, %p88
      %p90 = scmp.ne.s32.totalorder %s82, %s84
      %p91 = scmp.eq.s32.totalorder %s20, 1
      %p92 = por %p90, %p91
      %p93 = scmp.ne.s32.totalorder %s84, %s85
      %p94 = scmp.eq.s32.totalorder %s20, 0
      %p95 = por %p93, %p94
      %p96 = scmp.ne.s32.totalorder %s84, %s85
      %p97 = scmp.eq.s32.totalorder %s21, 1
      %p98 = por %p96, %p97
      %p100 = scmp.ne.s32.totalorder %s85, %s99
      %p101 = scmp.eq.s32.totalorder %s21, 0
      %p102 = por %p100, %p101
      %s103 = ssub.s32 %s23, %s30
      %p104 = scmp.eq.s32.totalorder %s103, 0
      %s106 = sadd.s32 %s105, 1
      %s107 = scalar_select %p104, %s105, %s106
      %p110 = pneg %p104
      %p111 = scmp.eq.s32.totalorder %s15, 1
      %p112 = por %p110, %p111
      %p113 = scmp.ne.s32.totalorder %s105, %s108
      %p114 = scmp.eq.s32.totalorder %s15, 0
      %p115 = por %p113, %p114
      %p116 = scmp.ne.s32.totalorder %s105, %s108
      %p117 = scmp.eq.s32.totalorder %s20, 1
      %p118 = por %p116, %p117
      %p119 = scmp.ne.s32.totalorder %s108, %s109
      %p120 = scmp.eq.s32.totalorder %s20, 0
      %p121 = por %p119, %p120
      %p122 = scmp.ne.s32.totalorder %s108, %s109
      %p123 = scmp.eq.s32.totalorder %s21, 1
      %p124 = por %p122, %p123
      %p126 = scmp.ne.s32.totalorder %s109, %s125
      %p127 = scmp.eq.s32.totalorder %s21, 0
      %p128 = por %p126, %p127
      %s129 = ssub.s32 %s23, %s30
      %p130 = scmp.eq.s32.totalorder %s129, 0
      %s132 = sadd.s32 %s131, 1
      %s133 = scalar_select %p130, %s131, %s132
      %p136 = pneg %p130
      %p137 = scmp.eq.s32.totalorder %s15, 1
      %p138 = por %p136, %p137
      %p139 = scmp.ne.s32.totalorder %s131, %s134
      %p140 = scmp.eq.s32.totalorder %s15, 0
      %p141 = por %p139, %p140
      %p142 = scmp.ne.s32.totalorder %s131, %s134
      %p143 = scmp.eq.s32.totalorder %s20, 1
      %p144 = por %p142, %p143
      %p145 = scmp.ne.s32.totalorder %s134, %s135
      %p146 = scmp.eq.s32.totalorder %s20, 0
      %p147 = por %p145, %p146
      %p148 = scmp.ne.s32.totalorder %s134, %s135
      %p149 = scmp.eq.s32.totalorder %s21, 1
      %p150 = por %p148, %p149
      %p152 = scmp.ne.s32.totalorder %s135, %s151
      %p153 = scmp.eq.s32.totalorder %s21, 0
      %p154 = por %p152, %p153
      %s156 = sadd.s32 %s155, 1
      %p159 = scmp.eq.s32.totalorder %s15, 1
      %p160 = scmp.ne.s32.totalorder %s155, %s157
      %p161 = scmp.eq.s32.totalorder %s15, 0
      %p162 = por %p160, %p161
      %p163 = scmp.ne.s32.totalorder %s155, %s157
      %p164 = scmp.eq.s32.totalorder %s20, 1
      %p165 = por %p163, %p164
      %p166 = scmp.ne.s32.totalorder %s157, %s158
      %p167 = scmp.eq.s32.totalorder %s20, 0
      %p168 = por %p166, %p167
      %p169 = scmp.ne.s32.totalorder %s157, %s158
      %p170 = scmp.eq.s32.totalorder %s21, 1
      %p171 = por %p169, %p170
      %p173 = scmp.ne.s32.totalorder %s158, %s172
      %p174 = scmp.eq.s32.totalorder %s21, 0
      %p175 = por %p173, %p174
      %s176 = ssub.s32 %s22, %s34
      %s177 = ssub.s32 %s23, %s30
      %s178 = sor.u32 %s176, %s177
      %p179 = scmp.eq.s32.totalorder %s178, 0
      %s181 = sadd.s32 %s180, 1
      %s182 = scalar_select %p179, %s180, %s181
      %p185 = pneg %p179
      %p186 = scmp.eq.s32.totalorder %s15, 1
      %p187 = por %p185, %p186
      %p188 = scmp.ne.s32.totalorder %s180, %s183
      %p189 = scmp.eq.s32.totalorder %s15, 0
      %p190 = por %p188, %p189
      %p191 = scmp.ne.s32.totalorder %s180, %s183
      %p192 = scmp.eq.s32.totalorder %s20, 1
      %p193 = por %p191, %p192
      %p194 = scmp.ne.s32.totalorder %s183, %s184
      %p195 = scmp.eq.s32.totalorder %s20, 0
      %p196 = por %p194, %p195
      %p197 = scmp.ne.s32.totalorder %s183, %s184
      %p198 = scmp.eq.s32.totalorder %s21, 1
      %p199 = por %p197, %p198
      %p201 = scmp.ne.s32.totalorder %s184, %s200
      %p202 = scmp.eq.s32.totalorder %s21, 0
      %p203 = por %p201, %p202
      %p204 = scmp.le.s32.totalorder 1, %s15
      %p205 = scmp.lt.s32.totalorder %s15, 3
      %p206 = pnand %p204, %p205
      %p207 = pneg %p206
      // Predicated region
      $region9: #{tpu_custom_call.1} parent=5 // pred_check
        _
      $region10: #{tpu_custom_call.1} parent=5 // pred_check_branch
        %209 = sbr.rel (%p206) target = $region12
      $region11: #{tpu_custom_call.1} parent=5 // pred_region
        %s210 = ssub.s32 %s15, 1
        // Predicated region
        $region13: #{tpu_custom_call.1} parent=11 // pred_check
          %p211 = pneg %p53
        $region14: #{tpu_custom_call.1} parent=11 // pred_check_branch
          %213 = sbr.rel (%p211) target = $region16
        $region15: #{tpu_custom_call.1} parent=11 // pred_region
          %s214 = smul.u32 2, %s24
          %p215 = scmp.lt.s32.totalorder %s214, 1
          %s216 = scalar_select %p215, %s214, 1
          %s217 = smul.addr %s216, 4
          %s218 = scalar_lea.vmem %s0, %s217
          %s219 = smul.u32 2, %s24
        $region16: #{tpu_custom_call.1} parent=11 // pred_fallthru
          _
        // Predicated region
        $region17: #{tpu_custom_call.1} parent=11 // pred_check
          %p220 = pneg %p74
        $region18: #{tpu_custom_call.1} parent=11 // pred_check_branch
          %222 = sbr.rel (%p220) target = $region20
        $region19: #{tpu_custom_call.1} parent=11 // pred_region
          _
        $region20: #{tpu_custom_call.1} parent=11 // pred_fallthru
          _
        // Predicated region
        $region21: #{tpu_custom_call.1} parent=11 // pred_check
          %p223 = pneg %p95
        $region22: #{tpu_custom_call.1} parent=11 // pred_check_branch
          %225 = sbr.rel (%p223) target = $region24
        $region23: #{tpu_custom_call.1} parent=11 // pred_region
          _
        $region24: #{tpu_custom_call.1} parent=11 // pred_fallthru
          _
        // Predicated region
        $region25: #{tpu_custom_call.1} parent=11 // pred_check
          %p226 = pneg %p168
        $region26: #{tpu_custom_call.1} parent=11 // pred_check_branch
          %228 = sbr.rel (%p226) target = $region28
        $region27: #{tpu_custom_call.1} parent=11 // pred_region
          _
        $region28: #{tpu_custom_call.1} parent=11 // pred_fallthru
          _
      $region12: #{tpu_custom_call.1} parent=5 // pred_fallthru
        _
      %p229 = scmp.lt.s32.totalorder %s15, 2
      // Predicated region
      $region29: #{tpu_custom_call.1} parent=5 // pred_check
        %p230 = pneg %p229
      $region30: #{tpu_custom_call.1} parent=5 // pred_check_branch
        %232 = sbr.rel (%p230) target = $region32
      $region31: #{tpu_custom_call.1} parent=5 // pred_region
        // Predicated region
        $region33: #{tpu_custom_call.1} parent=31 // pred_check
          %p233 = pneg %p115
        $region34: #{tpu_custom_call.1} parent=31 // pred_check_branch
          %235 = sbr.rel (%p233) target = $region36
        $region35: #{tpu_custom_call.1} parent=31 // pred_region
          %p236 = scmp.lt.s32.totalorder %s23, 1
          %s237 = scalar_select %p236, %s23, 1
          %s238 = smul.addr %s237, 4
          %s239 = scalar_lea.vmem %s3, %s238
        $region36: #{tpu_custom_call.1} parent=31 // pred_fallthru
          _
        // Predicated region
        $region37: #{tpu_custom_call.1} parent=31 // pred_check
          %p240 = pneg %p141
        $region38: #{tpu_custom_call.1} parent=31 // pred_check_branch
          %242 = sbr.rel (%p240) target = $region40
        $region39: #{tpu_custom_call.1} parent=31 // pred_region
          %p243 = scmp.lt.s32.totalorder %s23, 1
          %s244 = scalar_select %p243, %s23, 1
          %s245 = smul.addr %s244, 8
          %s246 = scalar_lea.vmem %s4, %s245
        $region40: #{tpu_custom_call.1} parent=31 // pred_fallthru
          _
      $region32: #{tpu_custom_call.1} parent=5 // pred_fallthru
        _
      %p247 = scmp.le.s32.totalorder 1, %s15
      %p248 = scmp.lt.s32.totalorder %s15, 3
      %p249 = pnand %p247, %p248
      %p250 = pneg %p249
      // Predicated region
      $region41: #{tpu_custom_call.1} parent=5 // pred_check
        _
      $region42: #{tpu_custom_call.1} parent=5 // pred_check_branch
        %252 = sbr.rel (%p249) target = $region44
      $region43: #{tpu_custom_call.1} parent=5 // pred_region
        %s253 = ssub.s32 %s15, 1
        %s254 = smul.u32 2, %s24
        %p255 = scmp.lt.s32.totalorder %s254, 1
        %s256 = scalar_select %p255, %s254, 1
        %s257 = smul.addr %s256, 4
        %s258 = scalar_lea.vmem %s0, %s257
        %p259 = pneg %p53
        %p260 = pneg %p50
        %p261 = pneg %p74
        %p262 = pneg %p71
        %p263 = pneg %p95
        %p264 = pneg %p92
        %p265 = scmp.lt.s32.totalorder %s25, 1
        %s266 = scalar_select %p265, %s25, 1
        %s267 = smul.addr %s266, 4
        %s268 = scalar_lea.vmem %s3, %s267
        %p269 = pneg %p121
        %p270 = pneg %p118
        %p271 = scmp.lt.s32.totalorder %s25, 1
        %s272 = scalar_select %p271, %s25, 1
        %s273 = smul.addr %s272, 8
        %s274 = scalar_lea.vmem %s4, %s273
        %p275 = pneg %p147
        %p276 = pneg %p144
        %p277 = pneg %p168
        %p278 = pneg %p165
        %p279 = pneg %p196
        %p280 = pneg %p193
        %s281 = sand.u32 %s183, 1
        %s282 = scalar_lea.sflag [#allocation6], %s281
        %s283 = sand.u32 %s183, 1
        %s284 = smul.addr %s283, 2
        %s285 = scalar_lea.vmem [#allocation5], %s284
        %s286 = smul.u32 2, %s24
        %p287 = scmp.lt.s32.totalorder %s286, 1
        %s288 = scalar_select %p287, %s286, 1
        %s289 = smul.addr %s288, 4
        %s290 = scalar_lea.vmem %s0, %s289
        %s291 = smul.u32 2, %s24
        %p292 = scmp.lt.s32.totalorder %s25, 1
        %s293 = scalar_select %p292, %s25, 1
        %s294 = smul.addr %s293, 4
        %s295 = scalar_lea.vmem %s3, %s294
        %p296 = scmp.lt.s32.totalorder %s25, 1
        %s297 = scalar_select %p296, %s25, 1
        %s298 = smul.addr %s297, 8
        %s299 = scalar_lea.vmem %s4, %s298
        %p301 = scmp.eq.s32.totalorder %s25, 0
        // Predicated region
        $region45: #{tpu_custom_call.1} parent=43 // pred_check
          %p302 = pneg %p301
        $region46: #{tpu_custom_call.1} parent=43 // pred_check_branch
          %304 = sbr.rel (%p302) target = $region48
        $region47: #{tpu_custom_call.1} parent=43 // pred_region
          %v305 = vld [vmem:[%s1] sm:$0xff]
          %v306 = vld [vmem:[%s1 + $0x8] sm:$0xff]
          %v307 = vld [vmem:[%s2] sm:$0xff]
          %v308 = vld [vmem:[%s2 + $0x8] sm:$0xff]
          %v309 = vld [vmem:[%s290] sm:$0xf]
          %311 = vset.pattern.permute.xlu0 0
          %312 = vperm.xlu0 %311, %v307
          %v313 = vpop.permute.xlu0 %312
          %316 = vset.pattern.permute.xlu0 0
          %317 = vperm.xlu0 %316, %v308
          %v318 = vpop.permute.xlu0 %317
          %vm320 = vcmask 31744
          %v322 = vsel %vm320, %v305, 0
          %v325 = vsel %vm320, %v306, 0
          %vm327 = vcmask 1043456
          %v329 = vsel %vm327, %v309, 0
          %331 = vmatprep.subr.mxu0 0.0
          %332 = vmatpush1.msra.mxu0 %v329
          %333 = vmatprep.subr.mxu0 0.0
          %334 = vmatpush1.msra.mxu0 0.0
          %335 = vmatprep.subr.mxu0 0.0
          %336 = vmatpush1.msra.mxu0 0.0
          %337 = vmatprep.subr.mxu0 0.0
          %338 = vmatpush1.msra.mxu0 0.0
          %339 = vmatprep.subr.mxu0 0.0
          %340 = vmatpush1.msra.mxu0 0.0
          %341 = vmatprep.subr.mxu0 0.0
          %342 = vmatpush1.msra.mxu0 0.0
          %343 = vmatprep.subr.mxu0 0.0
          %344 = vmatpush1.msra.mxu0 0.0
          %345 = vmatprep.subr.mxu0 0.0
          %346 = vmatpush1.msra.mxu0 0.0
          %347 = vmatprep.subr.mxu0 0.0
          %348 = vmatpush1.msra.mxu0 0.0
          %349 = vmatprep.subr.mxu0 0.0
          %350 = vmatpush1.msra.mxu0 0.0
          %351 = vmatprep.subr.mxu0 0.0
          %352 = vmatpush1.msra.mxu0 0.0
          %353 = vmatprep.subr.mxu0 0.0
          %354 = vmatpush1.msra.mxu0 0.0
          %355 = vmatprep.subr.mxu0 0.0
          %356 = vmatpush1.msra.mxu0 0.0
          %357 = vmatprep.subr.mxu0 0.0
          %358 = vmatpush1.msra.mxu0 0.0
          %359 = vmatprep.subr.mxu0 0.0
          %360 = vmatpush1.msra.mxu0 0.0
          %361 = vmatprep.subr.mxu0 0.0
          %362 = vmatpush1.msra.mxu0 0.0
          %363 = vmatprep.subr.mxu0 0.0
          %364 = vmatpush1.msra.mxu0 0.0
          %365 = vmatprep.subr.mxu0 0.0
          %366 = vmatpush1.msra.mxu0 0.0
          %367 = vmatprep.subr.mxu0 0.0
          %368 = vmatpush1.msra.mxu0 0.0
          %369 = vmatprep.subr.mxu0 0.0
          %370 = vmatpush1.msra.mxu0 0.0
          %371 = vmatprep.subr.mxu0 0.0
          %372 = vmatpush1.msra.mxu0 0.0
          %373 = vmatprep.subr.mxu0 0.0
          %374 = vmatpush1.msra.mxu0 0.0
          %375 = vmatprep.subr.mxu0 0.0
          %376 = vmatpush1.msra.mxu0 0.0
          %377 = vmatprep.subr.mxu0 0.0
          %378 = vmatpush1.msra.mxu0 0.0
          %379 = vmatprep.subr.mxu0 0.0
          %380 = vmatpush1.msra.mxu0 0.0
          %381 = vmatprep.subr.mxu0 0.0
          %382 = vmatpush1.msra.mxu0 0.0
          %383 = vmatprep.subr.mxu0 0.0
          %384 = vmatpush1.msra.mxu0 0.0
          %385 = vmatprep.subr.mxu0 0.0
          %386 = vmatpush1.msra.mxu0 0.0
          %387 = vmatprep.subr.mxu0 0.0
          %388 = vmatpush1.msra.mxu0 0.0
          %389 = vmatprep.subr.mxu0 0.0
          %390 = vmatpush1.msra.mxu0 0.0
          %391 = vmatprep.subr.mxu0 0.0
          %392 = vmatpush1.msra.mxu0 0.0
          %393 = vmatprep.subr.mxu0 0.0
          %394 = vmatpush1.msra.mxu0 0.0
          %395 = vmatprep.mubr.f32.mxu0 0.0
          %396 = vmatmul.mubr.f32.gmra.mrb[0].mxu0 %v322
          %v397 = vpop.f32.mrb[0].mxu0
          %v398 = vadd.f32 %v313, %v397
          %v399 = vpop.f32.mrb[0].mxu0
          %400 = vmatprep.mubr.f32.mxu0 0.0
          %401 = vmatmul.mubr.f32.gmra.mrb[0].mxu0 %v325
          %v402 = vpop.f32.mrb[0].mxu0
          %v403 = vadd.f32 %v318, %v402
          %v404 = vpop.f32.mrb[0].mxu0
          %405 = vdwg.mxu0
          %v406 = vmul.f32 %v398, %v398
          %v407 = vmul.f32 %v403, %v403
          %v408 = vadd.f32 %v406, %v407
          %v409 = vmul.f32 %v408, 0.8126984
          %v410 = vadd.f32 %v409, 0.003628118
          %vm411 = vcmp.eq.f32.partialorder %v398, 0.0
          %v412 = vsel %vm411, 1.0, %v398
          %v413 = vrcp.pop %v412
          %v414 = vmul.f32 %v403, %v413
          %vm415 = vcmp.lt.f32.partialorder %v414, 0.0
          %v416 = vsel %vm415, -1.0, 1.0
          %v417 = vand.u32 2147483647, %v414
          %vm418 = vcmp.gt.f32.partialorder %v417, 2.4142137
          %vm419 = vcmp.gt.f32.partialorder %v417, 0.41421357
          %vm420 = vmxor %vm418, 1
          %vm421 = vmand %vm419, %vm420
          %vm422 = vcmp.eq.f32.partialorder %v417, 0.0
          %v423 = vsel %vm422, 1.0, %v417
          %v424 = vrcp.pop %v423
          %v425 = vmul.f32 -1.0, %v424
          %v426 = vsub.f32 %v417, 1.0
          %v427 = vadd.f32 %v417, 1.0
          %v428 = vrcp.pop %v427
          %v429 = vmul.f32 %v426, %v428
          %v430 = vsel %vm421, %v429, %v417
          %v431 = vsel %vm418, %v425, %v430
          %v432 = vsel %vm421, 0.7853982, 0.0
          %v433 = vsel %vm418, 1.5707964, %v432
          %v434 = vmul.f32 %v431, %v431
          %v435 = vmul.f32 %v434, 0.080537446
          %v436 = vsub.f32 %v435, 0.13877685
          %v437 = vmul.f32 %v436, %v434
          %v438 = vadd.f32 %v437, 0.19977711
          %v439 = vmul.f32 %v438, %v434
          %v440 = vsub.f32 %v439, 0.3333295
          %v441 = vmul.f32 %v440, %v434
          %v442 = vmul.f32 %v441, %v431
          %v443 = vadd.f32 %v442, %v431
          %v444 = vadd.f32 %v433, %v443
          %v445 = vmul.f32 %v416, %v444
          %vm446 = vcmp.gt.f32.partialorder %v398, 0.0
          %vm447 = vcmp.ge.f32.partialorder %v403, 0.0
          %v448 = vadd.f32 %v445, 3.1415927
          %v449 = vsub.f32 %v445, 3.1415927
          %v450 = vsel %vm447, %v448, %v449
          %v451 = vsel %vm446, %v445, %v450
          %vm452 = vcmp.gt.f32.partialorder %v403, 0.0
          %vm453 = vcmp.lt.f32.partialorder %v403, 0.0
          %v454 = vsel %vm453, -1.5707964, 0.0
          %v455 = vsel %vm452, 1.5707964, %v454
          %v456 = vsel %vm411, %v455, %v451
          %v457 = vmul.f32 %v456, %v456
          %v458 = vmul.f32 %v457, 0.31830987
          %v459 = vpack.c.bf16 %v410, %v410
          %vm460 = vcmask 60416
          %461 = vst.msk [vmem:[#allocation2] sm:$0xf] %vm460, %v459
          %vm462 = vcmask 64512
          %463 = vst.msk [vmem:[#allocation3] sm:$0xff] %vm462, %v458
          %s464 = scalar_lea.vmem %s290, 4
          %v465 = vld [vmem:[%s464] sm:$0xf]
          %v467 = vsel %vm327, %v465, 0
          %469 = vmatprep.subr.mxu0 0.0
          %470 = vmatpush1.msra.mxu0 %v467
          %471 = vmatprep.subr.mxu0 0.0
          %472 = vmatpush1.msra.mxu0 0.0
          %473 = vmatprep.subr.mxu0 0.0
          %474 = vmatpush1.msra.mxu0 0.0
          %475 = vmatprep.subr.mxu0 0.0
          %476 = vmatpush1.msra.mxu0 0.0
          %477 = vmatprep.subr.mxu0 0.0
          %478 = vmatpush1.msra.mxu0 0.0
          %479 = vmatprep.subr.mxu0 0.0
          %480 = vmatpush1.msra.mxu0 0.0
          %481 = vmatprep.subr.mxu0 0.0
          %482 = vmatpush1.msra.mxu0 0.0
          %483 = vmatprep.subr.mxu0 0.0
          %484 = vmatpush1.msra.mxu0 0.0
          %485 = vmatprep.subr.mxu0 0.0
          %486 = vmatpush1.msra.mxu0 0.0
          %487 = vmatprep.subr.mxu0 0.0
          %488 = vmatpush1.msra.mxu0 0.0
          %489 = vmatprep.subr.mxu0 0.0
          %490 = vmatpush1.msra.mxu0 0.0
          %491 = vmatprep.subr.mxu0 0.0
          %492 = vmatpush1.msra.mxu0 0.0
          %493 = vmatprep.subr.mxu0 0.0
          %494 = vmatpush1.msra.mxu0 0.0
          %495 = vmatprep.subr.mxu0 0.0
          %496 = vmatpush1.msra.mxu0 0.0
          %497 = vmatprep.subr.mxu0 0.0
          %498 = vmatpush1.msra.mxu0 0.0
          %499 = vmatprep.subr.mxu0 0.0
          %500 = vmatpush1.msra.mxu0 0.0
          %501 = vmatprep.subr.mxu0 0.0
          %502 = vmatpush1.msra.mxu0 0.0
          %503 = vmatprep.subr.mxu0 0.0
          %504 = vmatpush1.msra.mxu0 0.0
          %505 = vmatprep.subr.mxu0 0.0
          %506 = vmatpush1.msra.mxu0 0.0
          %507 = vmatprep.subr.mxu0 0.0
          %508 = vmatpush1.msra.mxu0 0.0
          %509 = vmatprep.subr.mxu0 0.0
          %510 = vmatpush1.msra.mxu0 0.0
          %511 = vmatprep.subr.mxu0 0.0
          %512 = vmatpush1.msra.mxu0 0.0
          %513 = vmatprep.subr.mxu0 0.0
          %514 = vmatpush1.msra.mxu0 0.0
          %515 = vmatprep.subr.mxu0 0.0
          %516 = vmatpush1.msra.mxu0 0.0
          %517 = vmatprep.subr.mxu0 0.0
          %518 = vmatpush1.msra.mxu0 0.0
          %519 = vmatprep.subr.mxu0 0.0
          %520 = vmatpush1.msra.mxu0 0.0
          %521 = vmatprep.subr.mxu0 0.0
          %522 = vmatpush1.msra.mxu0 0.0
          %523 = vmatprep.subr.mxu0 0.0
          %524 = vmatpush1.msra.mxu0 0.0
          %525 = vmatprep.subr.mxu0 0.0
          %526 = vmatpush1.msra.mxu0 0.0
          %527 = vmatprep.subr.mxu0 0.0
          %528 = vmatpush1.msra.mxu0 0.0
          %529 = vmatprep.subr.mxu0 0.0
          %530 = vmatpush1.msra.mxu0 0.0
          %531 = vmatprep.subr.mxu0 0.0
          %532 = vmatpush1.msra.mxu0 0.0
          %533 = vmatprep.mubr.f32.mxu0 0.0
          %534 = vmatmul.mubr.f32.gmra.mrb[0].mxu0 %v322
          %v535 = vpop.f32.mrb[0].mxu0
          %v536 = vadd.f32 %v313, %v535
          %v537 = vpop.f32.mrb[0].mxu0
          %538 = vmatprep.mubr.f32.mxu0 0.0
          %539 = vmatmul.mubr.f32.gmra.mrb[0].mxu0 %v325
          %v540 = vpop.f32.mrb[0].mxu0
          %v541 = vadd.f32 %v318, %v540
          %v542 = vpop.f32.mrb[0].mxu0
          %543 = vdwg.mxu0
          %v544 = vmul.f32 %v536, %v536
          %v545 = vmul.f32 %v541, %v541
          %v546 = vadd.f32 %v544, %v545
          %v547 = vmul.f32 %v546, 0.8126984
          %v548 = vadd.f32 %v547, 0.003628118
          %vm549 = vcmp.eq.f32.partialorder %v536, 0.0
          %v550 = vsel %vm549, 1.0, %v536
          %v551 = vrcp.pop %v550
          %v552 = vmul.f32 %v541, %v551
          %vm553 = vcmp.lt.f32.partialorder %v552, 0.0
          %v554 = vsel %vm553, -1.0, 1.0
          %v555 = vand.u32 2147483647, %v552
          %vm556 = vcmp.gt.f32.partialorder %v555, 2.4142137
          %vm557 = vcmp.gt.f32.partialorder %v555, 0.41421357
          %vm558 = vmxor %vm556, 1
          %vm559 = vmand %vm557, %vm558
          %vm560 = vcmp.eq.f32.partialorder %v555, 0.0
          %v561 = vsel %vm560, 1.0, %v555
          %v562 = vrcp.pop %v561
          %v563 = vmul.f32 -1.0, %v562
          %v564 = vsub.f32 %v555, 1.0
          %v565 = vadd.f32 %v555, 1.0
          %v566 = vrcp.pop %v565
          %v567 = vmul.f32 %v564, %v566
          %v568 = vsel %vm559, %v567, %v555
          %v569 = vsel %vm556, %v563, %v568
          %v570 = vsel %vm559, 0.7853982, 0.0
          %v571 = vsel %vm556, 1.5707964, %v570
          %v572 = vmul.f32 %v569, %v569
          %v573 = vmul.f32 %v572, 0.080537446
          %v574 = vsub.f32 %v573, 0.13877685
          %v575 = vmul.f32 %v574, %v572
          %v576 = vadd.f32 %v575, 0.19977711
          %v577 = vmul.f32 %v576, %v572
          %v578 = vsub.f32 %v577, 0.3333295
          %v579 = vmul.f32 %v578, %v572
          %v580 = vmul.f32 %v579, %v569
          %v581 = vadd.f32 %v580, %v569
          %v582 = vadd.f32 %v571, %v581
          %v583 = vmul.f32 %v554, %v582
          %vm584 = vcmp.gt.f32.partialorder %v536, 0.0
          %vm585 = vcmp.ge.f32.partialorder %v541, 0.0
          %v586 = vadd.f32 %v583, 3.1415927
          %v587 = vsub.f32 %v583, 3.1415927
          %v588 = vsel %vm585, %v586, %v587
          %v589 = vsel %vm584, %v583, %v588
          %vm590 = vcmp.gt.f32.partialorder %v541, 0.0
          %vm591 = vcmp.lt.f32.partialorder %v541, 0.0
          %v592 = vsel %vm591, -1.5707964, 0.0
          %v593 = vsel %vm590, 1.5707964, %v592
          %v594 = vsel %vm549, %v593, %v589
          %v595 = vmul.f32 %v594, %v594
          %v596 = vmul.f32 %v595, 0.31830987
          %v597 = vpack.c.bf16 %v548, %v548
          %v599 = vrot.slane %v597, 4
          %vm601 = vcmask 64516
          %602 = vst.msk [vmem:[#allocation2] sm:$0xf0] %vm601, %v599
          %603 = vst.msk [vmem:[#allocation3 + $0x8] sm:$0xff] %vm462, %v596
          %vm604 = vcmask 7168
          %605 = vst.msk [vmem:[#allocation4] sm:$0xff] %vm604, 0.0
          %606 = vst.msk [vmem:[#allocation4 + $0x8] sm:$0xff] %vm604, 0.0
        $region48: #{tpu_custom_call.1} parent=43 // pred_fallthru
          _
        %v607 = vld [vmem:[#allocation2] sm:$0xff]
        %v608 = vld [vmem:[%s295] sm:$0xf]
        %vm609 = vcmask 64512
        %v611 = vsel %vm609, %v607, 0
        %vm613 = vcmask 1043456
        %v615 = vsel %vm613, %v608, 0
        %617 = vmatprep.subr.bf16.mxu0 0
        %618 = vmatpush1.bf16.msra.mxu0 %v615
        %619 = vmatprep.subr.bf16.mxu0 0
        %620 = vmatpush1.bf16.msra.mxu0 0
        %621 = vmatprep.subr.bf16.mxu0 0
        %622 = vmatpush1.bf16.msra.mxu0 0
        %623 = vmatprep.subr.bf16.mxu0 0
        %624 = vmatpush1.bf16.msra.mxu0 0
        %625 = vmatprep.subr.bf16.mxu0 0
        %626 = vmatpush1.bf16.msra.mxu0 0
        %627 = vmatprep.subr.bf16.mxu0 0
        %628 = vmatpush1.bf16.msra.mxu0 0
        %629 = vmatprep.subr.bf16.mxu0 0
        %630 = vmatpush1.bf16.msra.mxu0 0
        %631 = vmatprep.subr.bf16.mxu0 0
        %632 = vmatpush1.bf16.msra.mxu0 0
        %633 = vmatprep.subr.bf16.mxu0 0
        %634 = vmatpush1.bf16.msra.mxu0 0
        %635 = vmatprep.subr.bf16.mxu0 0
        %636 = vmatpush1.bf16.msra.mxu0 0
        %637 = vmatprep.subr.bf16.mxu0 0
        %638 = vmatpush1.bf16.msra.mxu0 0
        %639 = vmatprep.subr.bf16.mxu0 0
        %640 = vmatpush1.bf16.msra.mxu0 0
        %641 = vmatprep.subr.bf16.mxu0 0
        %642 = vmatpush1.bf16.msra.mxu0 0
        %643 = vmatprep.subr.bf16.mxu0 0
        %644 = vmatpush1.bf16.msra.mxu0 0
        %645 = vmatprep.subr.bf16.mxu0 0
        %646 = vmatpush1.bf16.msra.mxu0 0
        %647 = vmatprep.subr.bf16.mxu0 0
        %648 = vmatpush1.bf16.msra.mxu0 0
        %649 = vmatprep.mubr.bf16.mxu0 0
        %650 = vmatmul.mubr.bf16.gmra.mrb[0].mxu0 %v611
        %v651 = vpop.f32.mrb[0].mxu0
        %v652 = vadd.f32 0.0, %v651
        %v653 = vpop.f32.mrb[0].mxu0
        %v654 = vpop.f32.mrb[0].mxu0
        %v655 = vadd.f32 0.0, %v654
        %v656 = vpop.f32.mrb[0].mxu0
        %657 = vdwg.mxu0
        %v658 = vld [vmem:[#allocation4] sm:$0xff]
        %v659 = vld [vmem:[#allocation4 + $0x8] sm:$0xff]
        %v660 = vld [vmem:[#allocation3] sm:$0xff]
        %v661 = vld [vmem:[#allocation3 + $0x8] sm:$0xff]
        %v662 = vld [vmem:[%s299] sm:$0xff]
        %v664 = vsel %vm609, %v660, 0
        %v667 = vsel %vm609, %v661, 0
        %669 = vmatprep.subr.mxu0 0.0
        %670 = vmatpush1.msra.mxu0 %v662
        %671 = vmatprep.subr.mxu0 0.0
        %672 = vmatpush1.msra.mxu0 0.0
        %673 = vmatprep.subr.mxu0 0.0
        %674 = vmatpush1.msra.mxu0 0.0
        %675 = vmatprep.subr.mxu0 0.0
        %676 = vmatpush1.msra.mxu0 0.0
        %677 = vmatprep.subr.mxu0 0.0
        %678 = vmatpush1.msra.mxu0 0.0
        %679 = vmatprep.subr.mxu0 0.0
        %680 = vmatpush1.msra.mxu0 0.0
        %681 = vmatprep.subr.mxu0 0.0
        %682 = vmatpush1.msra.mxu0 0.0
        %683 = vmatprep.subr.mxu0 0.0
        %684 = vmatpush1.msra.mxu0 0.0
        %685 = vmatprep.subr.mxu0 0.0
        %686 = vmatpush1.msra.mxu0 0.0
        %687 = vmatprep.subr.mxu0 0.0
        %688 = vmatpush1.msra.mxu0 0.0
        %689 = vmatprep.subr.mxu0 0.0
        %690 = vmatpush1.msra.mxu0 0.0
        %691 = vmatprep.subr.mxu0 0.0
        %692 = vmatpush1.msra.mxu0 0.0
        %693 = vmatprep.subr.mxu0 0.0
        %694 = vmatpush1.msra.mxu0 0.0
        %695 = vmatprep.subr.mxu0 0.0
        %696 = vmatpush1.msra.mxu0 0.0
        %697 = vmatprep.subr.mxu0 0.0
        %698 = vmatpush1.msra.mxu0 0.0
        %699 = vmatprep.subr.mxu0 0.0
        %700 = vmatpush1.msra.mxu0 0.0
        %701 = vmatprep.subr.mxu0 0.0
        %702 = vmatpush1.msra.mxu0 0.0
        %703 = vmatprep.subr.mxu0 0.0
        %704 = vmatpush1.msra.mxu0 0.0
        %705 = vmatprep.subr.mxu0 0.0
        %706 = vmatpush1.msra.mxu0 0.0
        %707 = vmatprep.subr.mxu0 0.0
        %708 = vmatpush1.msra.mxu0 0.0
        %709 = vmatprep.subr.mxu0 0.0
        %710 = vmatpush1.msra.mxu0 0.0
        %711 = vmatprep.subr.mxu0 0.0
        %712 = vmatpush1.msra.mxu0 0.0
        %713 = vmatprep.subr.mxu0 0.0
        %714 = vmatpush1.msra.mxu0 0.0
        %715 = vmatprep.subr.mxu0 0.0
        %716 = vmatpush1.msra.mxu0 0.0
        %717 = vmatprep.subr.mxu0 0.0
        %718 = vmatpush1.msra.mxu0 0.0
        %719 = vmatprep.subr.mxu0 0.0
        %720 = vmatpush1.msra.mxu0 0.0
        %721 = vmatprep.subr.mxu0 0.0
        %722 = vmatpush1.msra.mxu0 0.0
        %723 = vmatprep.subr.mxu0 0.0
        %724 = vmatpush1.msra.mxu0 0.0
        %725 = vmatprep.subr.mxu0 0.0
        %726 = vmatpush1.msra.mxu0 0.0
        %727 = vmatprep.subr.mxu0 0.0
        %728 = vmatpush1.msra.mxu0 0.0
        %729 = vmatprep.subr.mxu0 0.0
        %730 = vmatpush1.msra.mxu0 0.0
        %731 = vmatprep.subr.mxu0 0.0
        %732 = vmatpush1.msra.mxu0 0.0
        %733 = vmatprep.mubr.f32.mxu0 0.0
        %734 = vmatmul.mubr.f32.gmra.mrb[0].mxu0 %v664
        %v735 = vpop.f32.mrb[0].mxu0
        %v736 = vadd.f32 0.0, %v735
        %v737 = vpop.f32.mrb[0].mxu0
        %738 = vmatprep.mubr.f32.mxu0 0.0
        %739 = vmatmul.mubr.f32.gmra.mrb[0].mxu0 %v667
        %v740 = vpop.f32.mrb[0].mxu0
        %v741 = vadd.f32 0.0, %v740
        %v742 = vpop.f32.mrb[0].mxu0
        %743 = vdwg.mxu0
        %745 = vset.pattern.permute.xlu0 0
        %746 = vperm.xlu0 %745, %v658
        %v747 = vpop.permute.xlu0 %746
        %750 = vset.pattern.permute.xlu0 0
        %751 = vperm.xlu0 %750, %v659
        %v752 = vpop.permute.xlu0 %751
        %v754 = vadd.f32 %v747, %v736
        %v755 = vadd.f32 %v752, %v741
        %v756 = vmul.f32 %v754, 0.15915494
        %v757 = vmul.f32 %v755, 0.15915494
        %v758 = vadd.f32 %v756, 0.5
        %v759 = vadd.f32 %v757, 0.5
        %v760 = vfloor.f32 %v758
        %v761 = vfloor.f32 %v759
        %v762 = vmul.f32 %v760, 6.2831855
        %v763 = vmul.f32 %v761, 6.2831855
        %v764 = vsub.f32 %v754, %v762
        %v765 = vsub.f32 %v755, %v763
        %768 = vrot.lane.b32.xlu0 %v764, 1
        %v769 = vpop.permute.xlu0 %768
        %770 = vrot.lane.b32.xlu0 %v765, 1
        %v771 = vpop.permute.xlu0 %770
        %vm774 = vcmask 7168
        %775 = vst.msk [vmem:[#allocation4] sm:$0xff] %vm774, %v769
        %776 = vst.msk [vmem:[#allocation4 + $0x8] sm:$0xff] %vm774, %v771
        %v777 = vand.u32 2147483647, %v754
        %vm778 = vcmp.le.f32.partialorder %v777, 0.7853982
        %vm779 = vcmp.lt.s32.totalorder %v754, 0
        %v780 = vand.u32 %v754, 2139095040
        %v781 = vshrl.u32 %v780, 23
        %v782 = vsub.s32 %v781, 127
        %v783 = vand.u32 2147483647, %v754
        %v784 = vand.u32 %v783, 8388607
        %v785 = vor.u32 %v784, 8388608
        %v786 = vsub.s32 0, %v785
        %v787 = vadd.s32 %v782, 1
        %vm788 = vcmp.gt.s32.totalorder %v787, 0
        %v789 = vsel %vm788, %v787, 0
        %v790 = vshrl.u32 %v789, 5
        %v791 = vand.u32 %v789, 31
        %v792 = vsub.s32 32, %v791
        %v793 = vshrl.u32 683565275, %v792
        %v794 = vshll.u32 683565275, %v791
        %v795 = vshrl.u32 2475754826, %v792
        %v796 = vor.u32 %v794, %v795
        %v797 = vshll.u32 2475754826, %v791
        %v798 = vshrl.u32 2131351028, %v792
        %v799 = vor.u32 %v797, %v798
        %v800 = vshll.u32 2131351028, %v791
        %v801 = vshrl.u32 2102212464, %v792
        %v802 = vor.u32 %v800, %v801
        %v803 = vshll.u32 2102212464, %v791
        %v804 = vshrl.u32 920167782, %v792
        %v805 = vor.u32 %v803, %v804
        %v806 = vshll.u32 920167782, %v791
        %v807 = vshrl.u32 1326507024, %v792
        %v808 = vor.u32 %v806, %v807
        %vm809 = vcmp.lt.s32.totalorder %v790, 1
        %vm810 = vcmp.lt.s32.totalorder %v790, 2
        %vm811 = vcmp.lt.s32.totalorder %v790, 3
        %vm812 = vcmp.lt.s32.totalorder %v790, 4
        %v813 = vsel %vm809, %v793, %v796
        %v814 = vsel %vm812, %v802, 2102212464
        %v815 = vsel %vm811, %v799, %v814
        %v816 = vsel %vm810, %v813, %v815
        %v817 = vsel %vm809, %v796, %v799
        %v818 = vsel %vm812, %v805, 920167782
        %v819 = vsel %vm811, %v802, %v818
        %v820 = vsel %vm810, %v817, %v819
        %v821 = vsel %vm809, %v799, %v802
        %v822 = vsel %vm812, %v808, 1326507024
        %v823 = vsel %vm811, %v805, %v822
        %v824 = vsel %vm810, %v821, %v823
        %v825 = vshll.u32 %v785, 8
        %v826 = vmul.u32.u64.compose %v825, %v824
        %v827 = vextract.low.u32 %v826
        %v828 = vextract.high.u32 %v826
        %v829 = vmul.u32.u64.compose %v825, %v820
        %v830 = vextract.low.u32 %v829
        %v831 = vextract.high.u32 %v829
        %v832 = vmul.u32 %v825, %v816
        %v833 = vadd.s32 %v828, %v830
        %vm834 = vc.u32 %v828, %v830
        %v835 = vadd.s32 %v831, 1
        %v836 = vsel %vm834, %v835, %v831
        %v837 = vadd.s32 %v832, %v836
        %v838 = vadd.s32 %v837, 536870912
        %v839 = vshrl.u32 %v838, 30
        %v840 = vshll.u32 %v839, 30
        %v841 = vsub.s32 %v837, %v840
        %vm842 = vcmp.lt.s32.totalorder %v841, 0
        %v843 = vsub.s32 0, %v841
        %v844 = vsel %vm842, %v843, %v841
        %v845 = vclz %v844
        %v846 = vsub.s32 %v845, 2
        %vm847 = vcmp.gt.s32.totalorder 0, %v846
        %v848 = vsel %vm847, 0, %v846
        %v849 = vsub.s32 32, %v848
        %v850 = vshll.u32 %v841, %v848
        %v851 = vshrl.u32 %v833, %v849
        %v852 = vor.u32 %v850, %v851
        %v853 = vsub.s32 4294967266, %v848
        %v854 = vadd.s32 %v853, 127
        %v855 = vshll.u32 %v854, 23
        %v856 = vor.u32 4788187, %v855
        %v857 = vand.u32 2147483647, %v856
        %v859 = vcvt.s32.f32 %v852
        %v860 = vmul.f32 %v859, %v857
        %v861 = vxor.u32 %v860, 2147483648
        %v862 = vsel %vm779, %v861, %v860
        %v863 = vsub.s32 4, %v839
        %v864 = vsel %vm779, %v863, %v839
        %v865 = vsel %vm778, %v754, %v862
        %v866 = vsel %vm778, 0, %v864
        %v867 = vcosq.f32.pop %v865
        %v868 = vsinq.f32.pop %v865
        %vm869 = vweird.f32 %v754
        %v870 = vadd.s32 %v866, 3
        %v871 = vand.u32 %v870, 3
        %vm872 = vcmp.lt.s32.totalorder %v871, 2
        %vm873 = vcmp.eq.s32.totalorder %v871, 0
        %v874 = vxor.u32 %v868, 2147483648
        %v875 = vsel %vm873, %v867, %v874
        %vm876 = vcmp.eq.s32.totalorder %v871, 2
        %v877 = vxor.u32 %v867, 2147483648
        %v878 = vsel %vm876, %v877, %v868
        %v879 = vsel %vm872, %v875, %v878
        %v880 = vsel %vm869, nan, %v879
        %v881 = vand.u32 2147483647, %v755
        %vm882 = vcmp.le.f32.partialorder %v881, 0.7853982
        %vm883 = vcmp.lt.s32.totalorder %v755, 0
        %v884 = vand.u32 %v755, 2139095040
        %v885 = vshrl.u32 %v884, 23
        %v886 = vsub.s32 %v885, 127
        %v887 = vand.u32 2147483647, %v755
        %v888 = vand.u32 %v887, 8388607
        %v889 = vor.u32 %v888, 8388608
        %v890 = vsub.s32 0, %v889
        %v891 = vadd.s32 %v886, 1
        %vm892 = vcmp.gt.s32.totalorder %v891, 0
        %v893 = vsel %vm892, %v891, 0
        %v894 = vshrl.u32 %v893, 5
        %v895 = vand.u32 %v893, 31
        %v896 = vsub.s32 32, %v895
        %v897 = vshrl.u32 683565275, %v896
        %v898 = vshll.u32 683565275, %v895
        %v899 = vshrl.u32 2475754826, %v896
        %v900 = vor.u32 %v898, %v899
        %v901 = vshll.u32 2475754826, %v895
        %v902 = vshrl.u32 2131351028, %v896
        %v903 = vor.u32 %v901, %v902
        %v904 = vshll.u32 2131351028, %v895
        %v905 = vshrl.u32 2102212464, %v896
        %v906 = vor.u32 %v904, %v905
        %v907 = vshll.u32 2102212464, %v895
        %v908 = vshrl.u32 920167782, %v896
        %v909 = vor.u32 %v907, %v908
        %v910 = vshll.u32 920167782, %v895
        %v911 = vshrl.u32 1326507024, %v896
        %v912 = vor.u32 %v910, %v911
        %vm913 = vcmp.lt.s32.totalorder %v894, 1
        %vm914 = vcmp.lt.s32.totalorder %v894, 2
        %vm915 = vcmp.lt.s32.totalorder %v894, 3
        %vm916 = vcmp.lt.s32.totalorder %v894, 4
        %v917 = vsel %vm913, %v897, %v900
        %v918 = vsel %vm916, %v906, 2102212464
        %v919 = vsel %vm915, %v903, %v918
        %v920 = vsel %vm914, %v917, %v919
        %v921 = vsel %vm913, %v900, %v903
        %v922 = vsel %vm916, %v909, 920167782
        %v923 = vsel %vm915, %v906, %v922
        %v924 = vsel %vm914, %v921, %v923
        %v925 = vsel %vm913, %v903, %v906
        %v926 = vsel %vm916, %v912, 1326507024
        %v927 = vsel %vm915, %v909, %v926
        %v928 = vsel %vm914, %v925, %v927
        %v929 = vshll.u32 %v889, 8
        %v930 = vmul.u32.u64.compose %v929, %v928
        %v931 = vextract.low.u32 %v930
        %v932 = vextract.high.u32 %v930
        %v933 = vmul.u32.u64.compose %v929, %v924
        %v934 = vextract.low.u32 %v933
        %v935 = vextract.high.u32 %v933
        %v936 = vmul.u32 %v929, %v920
        %v937 = vadd.s32 %v932, %v934
        %vm938 = vc.u32 %v932, %v934
        %v939 = vadd.s32 %v935, 1
        %v940 = vsel %vm938, %v939, %v935
        %v941 = vadd.s32 %v936, %v940
        %v942 = vadd.s32 %v941, 536870912
        %v943 = vshrl.u32 %v942, 30
        %v944 = vshll.u32 %v943, 30
        %v945 = vsub.s32 %v941, %v944
        %vm946 = vcmp.lt.s32.totalorder %v945, 0
        %v947 = vsub.s32 0, %v945
        %v948 = vsel %vm946, %v947, %v945
        %v949 = vclz %v948
        %v950 = vsub.s32 %v949, 2
        %vm951 = vcmp.gt.s32.totalorder 0, %v950
        %v952 = vsel %vm951, 0, %v950
        %v953 = vsub.s32 32, %v952
        %v954 = vshll.u32 %v945, %v952
        %v955 = vshrl.u32 %v937, %v953
        %v956 = vor.u32 %v954, %v955
        %v957 = vsub.s32 4294967266, %v952
        %v958 = vadd.s32 %v957, 127
        %v959 = vshll.u32 %v958, 23
        %v960 = vor.u32 4788187, %v959
        %v961 = vand.u32 2147483647, %v960
        %v963 = vcvt.s32.f32 %v956
        %v964 = vmul.f32 %v963, %v961
        %v965 = vxor.u32 %v964, 2147483648
        %v966 = vsel %vm883, %v965, %v964
        %v967 = vsub.s32 4, %v943
        %v968 = vsel %vm883, %v967, %v943
        %v969 = vsel %vm882, %v755, %v966
        %v970 = vsel %vm882, 0, %v968
        %v971 = vcosq.f32.pop %v969
        %v972 = vsinq.f32.pop %v969
        %vm973 = vweird.f32 %v755
        %v974 = vadd.s32 %v970, 3
        %v975 = vand.u32 %v974, 3
        %vm976 = vcmp.lt.s32.totalorder %v975, 2
        %vm977 = vcmp.eq.s32.totalorder %v975, 0
        %v978 = vxor.u32 %v972, 2147483648
        %v979 = vsel %vm977, %v971, %v978
        %vm980 = vcmp.eq.s32.totalorder %v975, 2
        %v981 = vxor.u32 %v971, 2147483648
        %v982 = vsel %vm980, %v981, %v972
        %v983 = vsel %vm976, %v979, %v982
        %v984 = vsel %vm973, nan, %v983
        %v985 = vmul.f32 %v880, %v652
        %v986 = vmul.f32 %v984, %v655
        %v987 = vld [vmem:[%s5] sm:$0x3]
        %vm988 = vcmask 130048
        %v990 = vsel %vm988, %v987, 0
        %992 = vmatprep.subr.mxu0 0.0
        %993 = vmatpush1.msra.mxu0 %v985
        %994 = vmatprep.subr.mxu0 0.0
        %995 = vmatpush1.msra.mxu0 %v986
        %996 = vmatprep.subr.mxu0 0.0
        %997 = vmatpush1.msra.mxu0 0.0
        %998 = vmatprep.subr.mxu0 0.0
        %999 = vmatpush1.msra.mxu0 0.0
        %1000 = vmatprep.subr.mxu0 0.0
        %1001 = vmatpush1.msra.mxu0 0.0
        %1002 = vmatprep.subr.mxu0 0.0
        %1003 = vmatpush1.msra.mxu0 0.0
        %1004 = vmatprep.subr.mxu0 0.0
        %1005 = vmatpush1.msra.mxu0 0.0
        %1006 = vmatprep.subr.mxu0 0.0
        %1007 = vmatpush1.msra.mxu0 0.0
        %1008 = vmatprep.subr.mxu0 0.0
        %1009 = vmatpush1.msra.mxu0 0.0
        %1010 = vmatprep.subr.mxu0 0.0
        %1011 = vmatpush1.msra.mxu0 0.0
        %1012 = vmatprep.subr.mxu0 0.0
        %1013 = vmatpush1.msra.mxu0 0.0
        %1014 = vmatprep.subr.mxu0 0.0
        %1015 = vmatpush1.msra.mxu0 0.0
        %1016 = vmatprep.subr.mxu0 0.0
        %1017 = vmatpush1.msra.mxu0 0.0
        %1018 = vmatprep.subr.mxu0 0.0
        %1019 = vmatpush1.msra.mxu0 0.0
        %1020 = vmatprep.subr.mxu0 0.0
        %1021 = vmatpush1.msra.mxu0 0.0
        %1022 = vmatprep.subr.mxu0 0.0
        %1023 = vmatpush1.msra.mxu0 0.0
        %1024 = vmatprep.subr.mxu0 0.0
        %1025 = vmatpush1.msra.mxu0 0.0
        %1026 = vmatprep.subr.mxu0 0.0
        %1027 = vmatpush1.msra.mxu0 0.0
        %1028 = vmatprep.subr.mxu0 0.0
        %1029 = vmatpush1.msra.mxu0 0.0
        %1030 = vmatprep.subr.mxu0 0.0
        %1031 = vmatpush1.msra.mxu0 0.0
        %1032 = vmatprep.subr.mxu0 0.0
        %1033 = vmatpush1.msra.mxu0 0.0
        %1034 = vmatprep.subr.mxu0 0.0
        %1035 = vmatpush1.msra.mxu0 0.0
        %1036 = vmatprep.subr.mxu0 0.0
        %1037 = vmatpush1.msra.mxu0 0.0
        %1038 = vmatprep.subr.mxu0 0.0
        %1039 = vmatpush1.msra.mxu0 0.0
        %1040 = vmatprep.subr.mxu0 0.0
        %1041 = vmatpush1.msra.mxu0 0.0
        %1042 = vmatprep.subr.mxu0 0.0
        %1043 = vmatpush1.msra.mxu0 0.0
        %1044 = vmatprep.subr.mxu0 0.0
        %1045 = vmatpush1.msra.mxu0 0.0
        %1046 = vmatprep.subr.mxu0 0.0
        %1047 = vmatpush1.msra.mxu0 0.0
        %1048 = vmatprep.subr.mxu0 0.0
        %1049 = vmatpush1.msra.mxu0 0.0
        %1050 = vmatprep.subr.mxu0 0.0
        %1051 = vmatpush1.msra.mxu0 0.0
        %1052 = vmatprep.subr.mxu0 0.0
        %1053 = vmatpush1.msra.mxu0 0.0
        %1054 = vmatprep.subr.mxu0 0.0
        %1055 = vmatpush1.msra.mxu0 0.0
        %1056 = vmatprep.mubr.f32.mxu0 0.0
        %1057 = vmatmul.mubr.f32.gmra.mrb[0].mxu0 %v990
        %v1058 = vpop.f32.mrb[0].mxu0
        %v1059 = vadd.f32 0.0, %v1058
        %v1060 = vpop.f32.mrb[0].mxu0
        %1061 = vdwg.mxu0
        %1062 = vst [vmem:[%s285] sm:$0x3] %v1059
        %s1063 = sand.u32 %s183, 1
        %s1064 = scalar_lea.sflag [#allocation6], %s1063
        %s1065 = sand.u32 %s183, 1
        %s1066 = smul.addr %s1065, 2
        %s1067 = scalar_lea.vmem [#allocation5], %s1066
        // Predicated region
        $region49: #{tpu_custom_call.1} parent=43 // pred_check
          %p1068 = pneg %p193
        $region50: #{tpu_custom_call.1} parent=43 // pred_check_branch
          %1070 = sbr.rel (%p1068) target = $region52
        $region51: #{tpu_custom_call.1} parent=43 // pred_region
          %s1072 = ssub.s32 32, 32
          %1073 = vsyncadd %s1064, %s1072
          %s1074 = smul.addr %s24, 2
          %s1075 = sadd.s32 %s25, %s1074
          %s1076 = smul.addr %s1075, 32
          %s1077 = scalar_lea.hbm %s6, %s1076
          %s1079 = sshll.u32 %s1067, 4
          %s1080 = int_to_ptr.vmem [resolvable:$true] %s1079
          %1082 = dma.vmem_to_hbm [thread:$0]  %s1080, 32, %s1077, %s1064
        $region52: #{tpu_custom_call.1} parent=43 // pred_fallthru
          _
      $region44: #{tpu_custom_call.1} parent=5 // pred_fallthru
        _
      %p1083 = scmp.le.s32.totalorder 2, %s15
      // Predicated region
      $region53: #{tpu_custom_call.1} parent=5 // pred_check
        %p1084 = pneg %p1083
      $region54: #{tpu_custom_call.1} parent=5 // pred_check_branch
        %1086 = sbr.rel (%p1084) target = $region56
      $region55: #{tpu_custom_call.1} parent=5 // pred_region
        %s1087 = ssub.s32 %s15, 2
        // Predicated region
        $region57: #{tpu_custom_call.1} parent=55 // pred_check
          %p1088 = pneg %p199
        $region58: #{tpu_custom_call.1} parent=55 // pred_check_branch
          %1090 = sbr.rel (%p1088) target = $region60
        $region59: #{tpu_custom_call.1} parent=55 // pred_region
          %s1091 = sand.u32 %s184, 1
          %s1092 = scalar_lea.sflag [#allocation6], %s1091
          %s1093 = sand.u32 %s184, 1
          %s1094 = smul.addr %s1093, 2
          %s1095 = scalar_lea.vmem [#allocation5], %s1094
          %1096 = dma.done %s1092, 32
        $region60: #{tpu_custom_call.1} parent=55 // pred_fallthru
          _
      $region56: #{tpu_custom_call.1} parent=5 // pred_fallthru
        _
    $region6: #{tpu_custom_call.1} parent=1 // loop_footer
      %s19 = sadd.s32 1, %s15
    $region7: #{tpu_custom_call.1} parent=1 // loop_footer_branch
      %14 = sbr.rel target = $region3
    $region8: #{tpu_custom_call.1} parent=1 // loop_exit
      _
    %1097 = vsyncpa [#allocation6], 1
    %s1098 = scalar_lea.sflag [#allocation6], 1
    %1099 = vsyncpa %s1098, 1

</llo_original>
